<compile_context>
chip_gen: v7x
topology: tpu7x:2x2x1
jax: 0.10.0
libtpu: 0.0.40
codegen_flags: <defaults>
</compile_context>

<pallas_src>
import jax
import jax.numpy as jnp
from jax.experimental import pallas as pl
from jax.experimental.pallas import tpu as pltpu


def _round_up(x: int, m: int) -> int:
    return (x + m - 1) // m * m


def _pad2d(x, shape):
    return jnp.pad(x, [(0, shape[0] - x.shape[0]), (0, shape[1] - x.shape[1])])


def _make_kernel(act_dtype):
    """act_dtype: dtype for the bias-add/tanh epilogue.  bf16 is best on
    v6e/v7x (bf16 EUP); pass jnp.float32 on v5e."""

    def kernel(z0_ref, w1_ref, b1_ref, w2_ref, b2_ref, w3_ref, wsk_ref, b3_ref,
               out_ref):
        z0 = z0_ref[...]                                          # [TB, Kp] bf16

        # hh = tanh(z0 @ W1 + b1)   (f32 accumulate, act_dtype tanh)
        h = jnp.dot(z0, w1_ref[...], preferred_element_type=jnp.float32)
        h = jnp.tanh((h + b1_ref[...]).astype(act_dtype))         # [TB, Hp]

        # hh = tanh(hh @ W2 + b2)
        h = jnp.dot(h.astype(w2_ref.dtype), w2_ref[...],
                    preferred_element_type=jnp.float32)
        h = jnp.tanh((h + b2_ref[...]).astype(act_dtype))         # [TB, Hp]

        # out = hh @ W3 + z0 @ Wskip + b3   (two lane-aligned dots, no concat)
        out = jnp.dot(h.astype(w3_ref.dtype), w3_ref[...],
                      preferred_element_type=jnp.float32)
        out = out + jnp.dot(z0, wsk_ref[...],
                            preferred_element_type=jnp.float32)
        out = out + b3_ref[...]                                   # [TB, Np] f32

        out_ref[...] = out.astype(out_ref.dtype)

    return kernel


def prepare_pnet01_params(params, weight_dtype=jnp.bfloat16):
    """One-time prep: PyTorch-layout params (w: [out, in], b: [out]) ->
    transposed, zero-padded, bf16 weights.  Call once, reuse across forwards."""
    nnmlp, nz0 = params["w1"].shape
    nz1 = params["w3"].shape[0]
    Kp = _round_up(nz0, 128)       # 32  -> 128 (lane-dense z0 / skip K)
    Hp = _round_up(nnmlp, 128)     # 600 -> 640 (lane-dense hidden)
    Np = _round_up(nz1, 128)       # 16  -> 128 (lane-dense, unmasked stores)

    return {
        "w1":  _pad2d(params["w1"].T, (Kp, Hp)).astype(weight_dtype),
        "b1":  _pad2d(params["b1"][None, :], (1, Hp)).astype(jnp.float32),
        "w2":  _pad2d(params["w2"].T, (Hp, Hp)).astype(weight_dtype),
        "b2":  _pad2d(params["b2"][None, :], (1, Hp)).astype(jnp.float32),
        "w3":  _pad2d(params["w3"].T, (Hp, Np)).astype(weight_dtype),
        "wsk": _pad2d(params["w_skip"].T, (Kp, Np)).astype(weight_dtype),
        "b3":  _pad2d(params["b3"][None, :], (1, Np)).astype(jnp.float32),
        "nz0": nz0, "nz1": nz1, "Kp": Kp, "Hp": Hp, "Np": Np,
    }


def _choose_tiling(B: int, tb_max: int):
    """Balanced batch tiling: minimal padding, grid >= 2 for mid-size B so
    both v7x TensorCores get work under dimension_semantics=('parallel',)."""
    B8 = _round_up(max(B, 1), 8)
    grid = pl.cdiv(B8, tb_max)
    if grid == 1 and B8 > 128:
        grid = 2
    TB = _round_up(pl.cdiv(B, grid), 8)
    grid = pl.cdiv(B, TB)
    return TB, grid


def pnet01_forward(z0, prep, *, tb_max=1024, act_dtype=jnp.bfloat16):
    """z0: [B, nz0]; prep: output of prepare_pnet01_params.  Returns [B, nz1]."""
    B = z0.shape[0]
    nz0, nz1 = prep["nz0"], prep["nz1"]
    Kp, Np = prep["Kp"], prep["Np"]
    in_dtype = prep["w1"].dtype

    TB, grid = _choose_tiling(B, tb_max)
    B_pad = TB * grid
    z0_p = jnp.pad(z0.astype(in_dtype), ((0, B_pad - B), (0, Kp - nz0)))

    # Weights/biases: block index never changes -> single-buffered, resident.
    def resident(shape):
        return pl.BlockSpec(shape, lambda i: (0, 0),
                            pipeline_mode=pl.Buffered(1))

    out = pl.pallas_call(
        _make_kernel(act_dtype),
        out_shape=jax.ShapeDtypeStruct((B_pad, Np), jnp.bfloat16),
        grid=(grid,),
        in_specs=[
            pl.BlockSpec((TB, Kp), lambda i: (i, 0)),   # z0 batch tile
            resident(prep["w1"].shape), resident(prep["b1"].shape),
            resident(prep["w2"].shape), resident(prep["b2"].shape),
            resident(prep["w3"].shape), resident(prep["wsk"].shape),
            resident(prep["b3"].shape),
        ],
        out_specs=pl.BlockSpec((TB, Np), lambda i: (i, 0)),
        compiler_params=pltpu.CompilerParams(
            dimension_semantics=("parallel",),          # shard batch across TCs
            vmem_limit_bytes=32 << 20,                  # headroom for TB=1024
        ),
    )(z0_p, prep["w1"], prep["b1"], prep["w2"], prep["b2"],
      prep["w3"], prep["wsk"], prep["b3"])

    return out[:B, :nz1].astype(z0.dtype)


def init_params(key, nz0, nz1, nnmlp=600, dtype=jnp.float32):
    """Deterministic synthetic init matching PyTorch Linear shapes."""
    ks = jax.random.split(key, 7)
    scale = 0.05
    return {
        "w1": scale * jax.random.normal(ks[0], (nnmlp, nz0), dtype),      # lin1.weight
        "b1": scale * jax.random.normal(ks[1], (nnmlp,), dtype),          # lin1.bias
        "w2": scale * jax.random.normal(ks[2], (nnmlp, nnmlp), dtype),    # lin2.weight
        "b2": scale * jax.random.normal(ks[3], (nnmlp,), dtype),          # lin2.bias
        "w3": scale * jax.random.normal(ks[4], (nz1, nnmlp), dtype),      # lin3.weight
        "b3": scale * jax.random.normal(ks[5], (nz1,), dtype),            # lin3.bias
        "w_skip": scale * jax.random.normal(ks[6], (nz1, nz0), dtype),    # lin_skip.weight
    }


def _reference(z0, p):
    h = jnp.tanh(z0 @ p["w1"].T + p["b1"])
    h = jnp.tanh(h @ p["w2"].T + p["b2"])
    return h @ p["w3"].T + p["b3"] + z0 @ p["w_skip"].T


if __name__ == "__main__":
    key = jax.random.PRNGKey(0)
    nz0, nz1 = 32, 16

    k_param, k_a, k_b = jax.random.split(key, 3)
    params = init_params(k_param, nz0, nz1)

    # One-time weight prep (transpose / pad / bf16 cast) hoisted off the hot path.
    prep = prepare_pnet01_params(params)

    # bf16 weights / activations / output => compare against the f32 reference
    # with loosened tolerance.
    for batch, kx in ((8, k_a), (300, k_b)):   # 300 -> grid=2, balanced remainder tiles
        z0 = jax.random.normal(kx, (batch, nz0), jnp.float32)
        out = jax.block_until_ready(pnet01_forward(z0, prep))
        ref = _reference(z0, params)
        assert out.shape == (batch, nz1)
        max_err = float(jnp.max(jnp.abs(out - ref)))
        assert jnp.allclose(out, ref, atol=3e-2, rtol=3e-2), \
            f"mismatch vs reference at batch={batch}: max|err|={max_err}"

    print("KERNEL_OK")
</pallas_src>

<mosaic_0001>
module attributes {stable_mosaic.version = 11 : i64} {
  func.func @kernel(%arg0: i32, %arg1: memref<8x128xbf16, #tpu.memory_space<vmem>>, %arg2: memref<128x640xbf16, #tpu.memory_space<vmem>>, %arg3: memref<1x640xf32, #tpu.memory_space<vmem>>, %arg4: memref<640x640xbf16, #tpu.memory_space<vmem>>, %arg5: memref<1x640xf32, #tpu.memory_space<vmem>>, %arg6: memref<640x128xbf16, #tpu.memory_space<vmem>>, %arg7: memref<128x128xbf16, #tpu.memory_space<vmem>>, %arg8: memref<1x128xf32, #tpu.memory_space<vmem>>, %arg9: memref<8x128xbf16, #tpu.memory_space<vmem>>) attributes {dimension_semantics = [#tpu.dimension_semantics<parallel>], iteration_bounds = array<i64: 1>, scalar_prefetch = 0 : i64, scratch_operands = 0 : i64, tpu.core_type = #tpu.core_type<tc>, window_params = [{transform_indices = @transform_0, window_bounds = array<i64: 8, 128>}, {pipeline_mode = #tpu.pipeline_mode<synchronous>, transform_indices = @transform_1, window_bounds = array<i64: 128, 640>}, {pipeline_mode = #tpu.pipeline_mode<synchronous>, transform_indices = @transform_2, window_bounds = array<i64: 1, 640>}, {pipeline_mode = #tpu.pipeline_mode<synchronous>, transform_indices = @transform_3, window_bounds = array<i64: 640, 640>}, {pipeline_mode = #tpu.pipeline_mode<synchronous>, transform_indices = @transform_4, window_bounds = array<i64: 1, 640>}, {pipeline_mode = #tpu.pipeline_mode<synchronous>, transform_indices = @transform_5, window_bounds = array<i64: 640, 128>}, {pipeline_mode = #tpu.pipeline_mode<synchronous>, transform_indices = @transform_6, window_bounds = array<i64: 128, 128>}, {pipeline_mode = #tpu.pipeline_mode<synchronous>, transform_indices = @transform_7, window_bounds = array<i64: 1, 128>}, {transform_indices = @transform_8, window_bounds = array<i64: 8, 128>}]} {
    %c0 = arith.constant 0 : index
    %c0_0 = arith.constant 0 : index
    %0 = vector.load %arg1[%c0, %c0_0] : memref<8x128xbf16, #tpu.memory_space<vmem>>, vector<8x128xbf16>
    %c0_1 = arith.constant 0 : index
    %c0_2 = arith.constant 0 : index
    %1 = vector.load %arg2[%c0_1, %c0_2] : memref<128x640xbf16, #tpu.memory_space<vmem>>, vector<128x640xbf16>
    %cst = arith.constant dense<0.000000e+00> : vector<8x640xf32>
    %2 = tpu.matmul %0, %1, %cst {dimension_numbers = #tpu.dot_dimension_numbers<[1], [0], [0], [1], [0, 0, 1, 1], [], []>} : vector<8x128xbf16>, vector<128x640xbf16>, vector<8x640xf32> -> vector<8x640xf32>
    %c0_3 = arith.constant 0 : index
    %c0_4 = arith.constant 0 : index
    %3 = vector.load %arg3[%c0_3, %c0_4] : memref<1x640xf32, #tpu.memory_space<vmem>>, vector<1x640xf32>
    %4 = vector.broadcast %3 : vector<1x640xf32> to vector<8x640xf32>
    %5 = arith.addf %2, %4 : vector<8x640xf32>
    %6 = arith.truncf %5 : vector<8x640xf32> to vector<8x640xbf16>
    %7 = math.tanh %6 : vector<8x640xbf16>
    %c0_5 = arith.constant 0 : index
    %c0_6 = arith.constant 0 : index
    %8 = vector.load %arg4[%c0_5, %c0_6] : memref<640x640xbf16, #tpu.memory_space<vmem>>, vector<640x640xbf16>
    %cst_7 = arith.constant dense<0.000000e+00> : vector<8x640xf32>
    %9 = tpu.matmul %7, %8, %cst_7 {dimension_numbers = #tpu.dot_dimension_numbers<[1], [0], [0], [1], [0, 0, 1, 1], [], []>} : vector<8x640xbf16>, vector<640x640xbf16>, vector<8x640xf32> -> vector<8x640xf32>
    %c0_8 = arith.constant 0 : index
    %c0_9 = arith.constant 0 : index
    %10 = vector.load %arg5[%c0_8, %c0_9] : memref<1x640xf32, #tpu.memory_space<vmem>>, vector<1x640xf32>
    %11 = vector.broadcast %10 : vector<1x640xf32> to vector<8x640xf32>
    %12 = arith.addf %9, %11 : vector<8x640xf32>
    %13 = arith.truncf %12 : vector<8x640xf32> to vector<8x640xbf16>
    %14 = math.tanh %13 : vector<8x640xbf16>
    %c0_10 = arith.constant 0 : index
    %c0_11 = arith.constant 0 : index
    %15 = vector.load %arg6[%c0_10, %c0_11] : memref<640x128xbf16, #tpu.memory_space<vmem>>, vector<640x128xbf16>
    %cst_12 = arith.constant dense<0.000000e+00> : vector<8x128xf32>
    %16 = tpu.matmul %14, %15, %cst_12 {dimension_numbers = #tpu.dot_dimension_numbers<[1], [0], [0], [1], [0, 0, 1, 1], [], []>} : vector<8x640xbf16>, vector<640x128xbf16>, vector<8x128xf32> -> vector<8x128xf32>
    %c0_13 = arith.constant 0 : index
    %c0_14 = arith.constant 0 : index
    %17 = vector.load %arg7[%c0_13, %c0_14] : memref<128x128xbf16, #tpu.memory_space<vmem>>, vector<128x128xbf16>
    %cst_15 = arith.constant dense<0.000000e+00> : vector<8x128xf32>
    %18 = tpu.matmul %0, %17, %cst_15 {dimension_numbers = #tpu.dot_dimension_numbers<[1], [0], [0], [1], [0, 0, 1, 1], [], []>} : vector<8x128xbf16>, vector<128x128xbf16>, vector<8x128xf32> -> vector<8x128xf32>
    %19 = arith.addf %16, %18 : vector<8x128xf32>
    %c0_16 = arith.constant 0 : index
    %c0_17 = arith.constant 0 : index
    %20 = vector.load %arg8[%c0_16, %c0_17] : memref<1x128xf32, #tpu.memory_space<vmem>>, vector<1x128xf32>
    %21 = vector.broadcast %20 : vector<1x128xf32> to vector<8x128xf32>
    %22 = arith.addf %19, %21 : vector<8x128xf32>
    %23 = arith.truncf %22 : vector<8x128xf32> to vector<8x128xbf16>
    %c0_18 = arith.constant 0 : index
    %c0_19 = arith.constant 0 : index
    %24 = vector.load %arg9[%c0_18, %c0_19] : memref<8x128xbf16, #tpu.memory_space<vmem>>, vector<8x128xbf16>
    tpu.vector_store %arg9[%c0_18, %c0_19], %23 {strides = array<i32>} : memref<8x128xbf16, #tpu.memory_space<vmem>>, vector<8x128xbf16>,
    return
  }
  func.func @transform_0(%arg0: i32) -> (i32, i32) {
    %c0_i32 = arith.constant 0 : i32
    %c0_i32_0 = arith.constant 0 : i32
    return %arg0, %c0_i32 : i32, i32
  }
  func.func @transform_1(%arg0: i32) -> (i32, i32) {
    %c0_i32 = arith.constant 0 : i32
    %c0_i32_0 = arith.constant 0 : i32
    %c0_i32_1 = arith.constant 0 : i32
    return %c0_i32, %c0_i32_0 : i32, i32
  }
  func.func @transform_2(%arg0: i32) -> (i32, i32) {
    %c0_i32 = arith.constant 0 : i32
    %c0_i32_0 = arith.constant 0 : i32
    %c0_i32_1 = arith.constant 0 : i32
    return %c0_i32, %c0_i32_0 : i32, i32
  }
  func.func @transform_3(%arg0: i32) -> (i32, i32) {
    %c0_i32 = arith.constant 0 : i32
    %c0_i32_0 = arith.constant 0 : i32
    %c0_i32_1 = arith.constant 0 : i32
    return %c0_i32, %c0_i32_0 : i32, i32
  }
  func.func @transform_4(%arg0: i32) -> (i32, i32) {
    %c0_i32 = arith.constant 0 : i32
    %c0_i32_0 = arith.constant 0 : i32
    %c0_i32_1 = arith.constant 0 : i32
    return %c0_i32, %c0_i32_0 : i32, i32
  }
  func.func @transform_5(%arg0: i32) -> (i32, i32) {
    %c0_i32 = arith.constant 0 : i32
    %c0_i32_0 = arith.constant 0 : i32
    %c0_i32_1 = arith.constant 0 : i32
    return %c0_i32, %c0_i32_0 : i32, i32
  }
  func.func @transform_6(%arg0: i32) -> (i32, i32) {
    %c0_i32 = arith.constant 0 : i32
    %c0_i32_0 = arith.constant 0 : i32
    %c0_i32_1 = arith.constant 0 : i32
    return %c0_i32, %c0_i32_0 : i32, i32
  }
  func.func @transform_7(%arg0: i32) -> (i32, i32) {
    %c0_i32 = arith.constant 0 : i32
    %c0_i32_0 = arith.constant 0 : i32
    %c0_i32_1 = arith.constant 0 : i32
    return %c0_i32, %c0_i32_0 : i32, i32
  }
  func.func @transform_8(%arg0: i32) -> (i32, i32) {
    %c0_i32 = arith.constant 0 : i32
    %c0_i32_0 = arith.constant 0 : i32
    return %arg0, %c0_i32 : i32, i32
  }
}

</mosaic_0001>

<llo_original>
// kernel: tpu_custom_call.1
$region0: #{tpu_custom_call.1}
  #allocation0 [shape = 'u32[]', space=smem, size = 0x4, offset = 0x4, fixed_abs, tag = 'smem constant byte address 0x4 - core index']
  #allocation1 [shape = 'u32[144,128]{1,0:T(1,128)}', space=vmem, size = 0x12000, scoped, tag = 'internal scratch']
  %s0 = inlined_call_operand.hbm [shape: bf16[8,128], index: 0, kind: input, shape index: {}]
  %s1 = inlined_call_operand.hbm [shape: bf16[128,640], index: 1, kind: input, shape index: {}]
  %s2 = inlined_call_operand.vmem [shape: f32[1,640], index: 2, kind: input, shape index: {}]
  %s3 = inlined_call_operand.hbm [shape: bf16[640,640], index: 3, kind: input, shape index: {}]
  %s4 = inlined_call_operand.vmem [shape: f32[1,640], index: 4, kind: input, shape index: {}]
  %s5 = inlined_call_operand.hbm [shape: bf16[640,128], index: 5, kind: input, shape index: {}]
  %s6 = inlined_call_operand.hbm [shape: bf16[128,128], index: 6, kind: input, shape index: {}]
  %s7 = inlined_call_operand.vmem [shape: f32[1,128], index: 7, kind: input, shape index: {}]
  %s8 = inlined_call_operand.hbm [shape: bf16[8,128], index: 8, kind: output, shape index: {}]
  %s9 = sld [smem:[#allocation0]]
  $region62: #{tpu_custom_call.1} parent=0
    _
  %s11 = ssub.s32 1, %s9
  %s12 = scalar_select 0, %s11, %s9
  $region1: #{tpu_custom_call.1} parent=0
    #allocation2 [shape = 'u8[2048]{0}', space=vmem, size = 0x800, scoped, tag = 'input window, operand 0, single buffered']
    #allocation3 [shape = 's32[1]{0}', space=sflag, size = 0x4, scoped, tag = 'scoped memory for tpu_custom_call.1']
    #allocation4 [shape = 's32[1]{0}', space=sflag, size = 0x4, scoped, tag = 'scoped memory for tpu_custom_call.1']
    #allocation5 [shape = 'u8[163840]{0}', space=vmem, size = 0x28000, scoped, tag = 'input window, operand 1, single buffered']
    #allocation6 [shape = 's32[1]{0}', space=sflag, size = 0x4, scoped, tag = 'scoped memory for tpu_custom_call.1']
    #allocation7 [shape = 'u8[819200]{0}', space=vmem, size = 0xc8000, scoped, tag = 'input window, operand 3, single buffered']
    #allocation8 [shape = 'u8[163840]{0}', space=vmem, size = 0x28000, scoped, tag = 'input window, operand 5, single buffered']
    #allocation9 [shape = 's32[1]{0}', space=sflag, size = 0x4, scoped, tag = 'scoped memory for tpu_custom_call.1']
    #allocation10 [shape = 'u8[32768]{0}', space=vmem, size = 0x8000, scoped, tag = 'input window, operand 6, single buffered']
    #allocation11 [shape = 'u8[2048]{0}', space=vmem, size = 0x800, scoped, tag = 'output window, operand 0, single buffered']
    %13 = vsyncpa [#allocation3], 0
    %14 = vsyncpa [#allocation6], 0
    %15 = vsyncpa [#allocation9], 0
    %16 = vsyncpa [#allocation4], 0
    // Predicated region
    $region2: #{tpu_custom_call.1} parent=1 // pred_check
      _
    $region3: #{tpu_custom_call.1} parent=1 // pred_check_branch
      %18 = sbr.rel (0) target = $region5
    $region4: #{tpu_custom_call.1} parent=1 // pred_region
      %s20 = ssub.s32 64, 64
      %21 = vsyncadd [#allocation3], %s20
      %s23 = sshll.u32 [#allocation2], 4
      %s24 = int_to_ptr.vmem [resolvable:$true] %s23
      %26 = dma.hbm_to_vmem [thread:$0]  %s0, 64, %s24, [#allocation3]
    $region5: #{tpu_custom_call.1} parent=1 // pred_fallthru
      _
    // Predicated region
    $region6: #{tpu_custom_call.1} parent=1 // pred_check
      _
    $region7: #{tpu_custom_call.1} parent=1 // pred_check_branch
      %28 = sbr.rel (0) target = $region9
    $region8: #{tpu_custom_call.1} parent=1 // pred_region
      %s30 = ssub.s32 5120, 5120
      %31 = vsyncadd [#allocation6], %s30
      %s32 = sshll.u32 [#allocation5], 4
      %s33 = int_to_ptr.vmem [resolvable:$true] %s32
      %38 = dma.hbm_to_vmem [thread:$0]  %s1, 5120, %s33, [#allocation6], 320, 320, 20
    $region9: #{tpu_custom_call.1} parent=1 // pred_fallthru
      _
    // Predicated region
    $region10: #{tpu_custom_call.1} parent=1 // pred_check
      _
    $region11: #{tpu_custom_call.1} parent=1 // pred_check_branch
      %40 = sbr.rel (0) target = $region13
    $region12: #{tpu_custom_call.1} parent=1 // pred_region
      _
    $region13: #{tpu_custom_call.1} parent=1 // pred_fallthru
      _
    // Predicated region
    $region14: #{tpu_custom_call.1} parent=1 // pred_check
      _
    $region15: #{tpu_custom_call.1} parent=1 // pred_check_branch
      %42 = sbr.rel (0) target = $region17
    $region16: #{tpu_custom_call.1} parent=1 // pred_region
      %s44 = ssub.s32 25600, 25600
      %45 = vsyncadd [#allocation6], %s44
      %s46 = sshll.u32 [#allocation7], 4
      %s47 = int_to_ptr.vmem [resolvable:$true] %s46
      %52 = dma.hbm_to_vmem [thread:$0]  %s3, 25600, %s47, [#allocation6], 320, 320, 20
    $region17: #{tpu_custom_call.1} parent=1 // pred_fallthru
      _
    // Predicated region
    $region18: #{tpu_custom_call.1} parent=1 // pred_check
      _
    $region19: #{tpu_custom_call.1} parent=1 // pred_check_branch
      %54 = sbr.rel (0) target = $region21
    $region20: #{tpu_custom_call.1} parent=1 // pred_region
      _
    $region21: #{tpu_custom_call.1} parent=1 // pred_fallthru
      _
    // Predicated region
    $region22: #{tpu_custom_call.1} parent=1 // pred_check
      _
    $region23: #{tpu_custom_call.1} parent=1 // pred_check_branch
      %56 = sbr.rel (0) target = $region25
    $region24: #{tpu_custom_call.1} parent=1 // pred_region
      %s58 = ssub.s32 5120, 5120
      %59 = vsyncadd [#allocation9], %s58
      %s60 = sshll.u32 [#allocation8], 4
      %s61 = int_to_ptr.vmem [resolvable:$true] %s60
      %66 = dma.hbm_to_vmem [thread:$0]  %s5, 5120, %s61, [#allocation9], 64, 64, 4
    $region25: #{tpu_custom_call.1} parent=1 // pred_fallthru
      _
    // Predicated region
    $region26: #{tpu_custom_call.1} parent=1 // pred_check
      _
    $region27: #{tpu_custom_call.1} parent=1 // pred_check_branch
      %68 = sbr.rel (0) target = $region29
    $region28: #{tpu_custom_call.1} parent=1 // pred_region
      %s70 = ssub.s32 1024, 1024
      %71 = vsyncadd [#allocation9], %s70
      %s72 = sshll.u32 [#allocation10], 4
      %s73 = int_to_ptr.vmem [resolvable:$true] %s72
      %78 = dma.hbm_to_vmem [thread:$0]  %s6, 1024, %s73, [#allocation9], 64, 64, 4
    $region29: #{tpu_custom_call.1} parent=1 // pred_fallthru
      _
    // Predicated region
    $region30: #{tpu_custom_call.1} parent=1 // pred_check
      _
    $region31: #{tpu_custom_call.1} parent=1 // pred_check_branch
      %80 = sbr.rel (0) target = $region33
    $region32: #{tpu_custom_call.1} parent=1 // pred_region
      _
    $region33: #{tpu_custom_call.1} parent=1 // pred_fallthru
      _
    // Predicated region
    $region34: #{tpu_custom_call.1} parent=1 // pred_check
      _
    $region35: #{tpu_custom_call.1} parent=1 // pred_check_branch
      %82 = sbr.rel (0) target = $region37
    $region36: #{tpu_custom_call.1} parent=1 // pred_region
      %83 = dma.done [#allocation3], 64
    $region37: #{tpu_custom_call.1} parent=1 // pred_fallthru
      _
    // Predicated region
    $region38: #{tpu_custom_call.1} parent=1 // pred_check
      _
    $region39: #{tpu_custom_call.1} parent=1 // pred_check_branch
      %85 = sbr.rel (0) target = $region41
    $region40: #{tpu_custom_call.1} parent=1 // pred_region
      %86 = dma.done [#allocation6], 5120
    $region41: #{tpu_custom_call.1} parent=1 // pred_fallthru
      _
    // Predicated region
    $region42: #{tpu_custom_call.1} parent=1 // pred_check
      _
    $region43: #{tpu_custom_call.1} parent=1 // pred_check_branch
      %88 = sbr.rel (0) target = $region45
    $region44: #{tpu_custom_call.1} parent=1 // pred_region
      %89 = dma.done [#allocation6], 25600
    $region45: #{tpu_custom_call.1} parent=1 // pred_fallthru
      _
    // Predicated region
    $region46: #{tpu_custom_call.1} parent=1 // pred_check
      _
    $region47: #{tpu_custom_call.1} parent=1 // pred_check_branch
      %91 = sbr.rel (0) target = $region49
    $region48: #{tpu_custom_call.1} parent=1 // pred_region
      %92 = dma.done [#allocation9], 5120
    $region49: #{tpu_custom_call.1} parent=1 // pred_fallthru
      _
    // Predicated region
    $region50: #{tpu_custom_call.1} parent=1 // pred_check
      _
    $region51: #{tpu_custom_call.1} parent=1 // pred_check_branch
      %94 = sbr.rel (0) target = $region53
    $region52: #{tpu_custom_call.1} parent=1 // pred_region
      %95 = dma.done [#allocation9], 1024
    $region53: #{tpu_custom_call.1} parent=1 // pred_fallthru
      _
    %v97 = vld [vmem:[#allocation2] sm:$0xf]
    %v98 = vld [vmem:[#allocation5] sm:$0xff]
    %v99 = vld [vmem:[#allocation5 + $0x8] sm:$0xff]
    %v100 = vld [vmem:[#allocation5 + $0x10] sm:$0xf]
    %v101 = vld [vmem:[#allocation5 + $0x14] sm:$0xff]
    %v102 = vld [vmem:[#allocation5 + $0x1c] sm:$0xff]
    %v103 = vld [vmem:[#allocation5 + $0x24] sm:$0xf]
    %v104 = vld [vmem:[#allocation5 + $0x28] sm:$0xff]
    %v105 = vld [vmem:[#allocation5 + $0x30] sm:$0xff]
    %v106 = vld [vmem:[#allocation5 + $0x38] sm:$0xf]
    %v107 = vld [vmem:[#allocation5 + $0x3c] sm:$0xff]
    %v108 = vld [vmem:[#allocation5 + $0x44] sm:$0xff]
    %v109 = vld [vmem:[#allocation5 + $0x4c] sm:$0xf]
    %v110 = vld [vmem:[#allocation5 + $0x50] sm:$0xff]
    %v111 = vld [vmem:[#allocation5 + $0x58] sm:$0xff]
    %v112 = vld [vmem:[#allocation5 + $0x60] sm:$0xf]
    %v113 = vld [vmem:[#allocation5 + $0x64] sm:$0xff]
    %v114 = vld [vmem:[#allocation5 + $0x6c] sm:$0xff]
    %v115 = vld [vmem:[#allocation5 + $0x74] sm:$0xf]
    %v116 = vld [vmem:[#allocation5 + $0x78] sm:$0xff]
    %v117 = vld [vmem:[#allocation5 + $0x80] sm:$0xff]
    %v118 = vld [vmem:[#allocation5 + $0x88] sm:$0xf]
    %v119 = vld [vmem:[#allocation5 + $0x8c] sm:$0xff]
    %v120 = vld [vmem:[#allocation5 + $0x94] sm:$0xff]
    %v121 = vld [vmem:[#allocation5 + $0x9c] sm:$0xf]
    %v122 = vld [vmem:[#allocation5 + $0xa0] sm:$0xff]
    %v123 = vld [vmem:[#allocation5 + $0xa8] sm:$0xff]
    %v124 = vld [vmem:[#allocation5 + $0xb0] sm:$0xf]
    %v125 = vld [vmem:[#allocation5 + $0xb4] sm:$0xff]
    %v126 = vld [vmem:[#allocation5 + $0xbc] sm:$0xff]
    %v127 = vld [vmem:[#allocation5 + $0xc4] sm:$0xf]
    %v128 = vld [vmem:[#allocation5 + $0xc8] sm:$0xff]
    %v129 = vld [vmem:[#allocation5 + $0xd0] sm:$0xff]
    %v130 = vld [vmem:[#allocation5 + $0xd8] sm:$0xf]
    %v131 = vld [vmem:[#allocation5 + $0xdc] sm:$0xff]
    %v132 = vld [vmem:[#allocation5 + $0xe4] sm:$0xff]
    %v133 = vld [vmem:[#allocation5 + $0xec] sm:$0xf]
    %v134 = vld [vmem:[#allocation5 + $0xf0] sm:$0xff]
    %v135 = vld [vmem:[#allocation5 + $0xf8] sm:$0xff]
    %v136 = vld [vmem:[#allocation5 + $0x100] sm:$0xf]
    %v137 = vld [vmem:[#allocation5 + $0x104] sm:$0xff]
    %v138 = vld [vmem:[#allocation5 + $0x10c] sm:$0xff]
    %v139 = vld [vmem:[#allocation5 + $0x114] sm:$0xf]
    %v140 = vld [vmem:[#allocation5 + $0x118] sm:$0xff]
    %v141 = vld [vmem:[#allocation5 + $0x120] sm:$0xff]
    %v142 = vld [vmem:[#allocation5 + $0x128] sm:$0xf]
    %v143 = vld [vmem:[#allocation5 + $0x12c] sm:$0xff]
    %v144 = vld [vmem:[#allocation5 + $0x134] sm:$0xff]
    %v145 = vld [vmem:[#allocation5 + $0x13c] sm:$0xf]
    %v146 = vld [vmem:[%s2] sm:$0x1f]
    %v148 = vlaneseq
    %v149 = vshrl.u32 %v148, 7
    %v150 = vsub.s32 0, %v149
    %v151 = vrot.slane %v146, %v150
    %v152 = vlaneseq
    %v153 = vshrl.u32 %v152, 7
    %v154 = vsub.s32 1, %v153
    %v155 = vrot.slane %v146, %v154
    %v156 = vlaneseq
    %v157 = vshrl.u32 %v156, 7
    %v158 = vsub.s32 2, %v157
    %v159 = vrot.slane %v146, %v158
    %v160 = vlaneseq
    %v161 = vshrl.u32 %v160, 7
    %v162 = vsub.s32 3, %v161
    %v163 = vrot.slane %v146, %v162
    %v164 = vlaneseq
    %v165 = vshrl.u32 %v164, 7
    %v166 = vsub.s32 4, %v165
    %v167 = vrot.slane %v146, %v166
    %v221 = vunpack.c.l.b16 %v98
    %v222 = vunpack.c.h.b16 %v98
    %v223 = vunpack.c.l.b16 %v99
    %v224 = vunpack.c.h.b16 %v99
    %v225 = vunpack.c.l.b16 %v100
    %v226 = vunpack.c.l.b16 %v101
    %v227 = vunpack.c.h.b16 %v101
    %v228 = vunpack.c.l.b16 %v102
    %v229 = vunpack.c.h.b16 %v102
    %v230 = vunpack.c.l.b16 %v103
    %v231 = vunpack.c.l.b16 %v104
    %v232 = vunpack.c.h.b16 %v104
    %v233 = vunpack.c.l.b16 %v105
    %v234 = vunpack.c.h.b16 %v105
    %v235 = vunpack.c.l.b16 %v106
    %v236 = vunpack.c.l.b16 %v107
    %v237 = vunpack.c.h.b16 %v107
    %v238 = vunpack.c.l.b16 %v108
    %v239 = vunpack.c.h.b16 %v108
    %v240 = vunpack.c.l.b16 %v109
    %v241 = vunpack.c.l.b16 %v110
    %v242 = vunpack.c.h.b16 %v110
    %v243 = vunpack.c.l.b16 %v111
    %v244 = vunpack.c.h.b16 %v111
    %v245 = vunpack.c.l.b16 %v112
    %v246 = vunpack.c.l.b16 %v113
    %v247 = vunpack.c.h.b16 %v113
    %v248 = vunpack.c.l.b16 %v114
    %v249 = vunpack.c.h.b16 %v114
    %v250 = vunpack.c.l.b16 %v115
    %v251 = vunpack.c.l.b16 %v116
    %v252 = vunpack.c.h.b16 %v116
    %v253 = vunpack.c.l.b16 %v117
    %v254 = vunpack.c.h.b16 %v117
    %v255 = vunpack.c.l.b16 %v118
    %v256 = vunpack.c.l.b16 %v119
    %v257 = vunpack.c.h.b16 %v119
    %v258 = vunpack.c.l.b16 %v120
    %v259 = vunpack.c.h.b16 %v120
    %v260 = vunpack.c.l.b16 %v121
    %v261 = vunpack.c.l.b16 %v122
    %v262 = vunpack.c.h.b16 %v122
    %v263 = vunpack.c.l.b16 %v123
    %v264 = vunpack.c.h.b16 %v123
    %v265 = vunpack.c.l.b16 %v124
    %v266 = vunpack.c.l.b16 %v125
    %v267 = vunpack.c.h.b16 %v125
    %v268 = vunpack.c.l.b16 %v126
    %v269 = vunpack.c.h.b16 %v126
    %v270 = vunpack.c.l.b16 %v127
    %v271 = vunpack.c.l.b16 %v128
    %v272 = vunpack.c.h.b16 %v128
    %v273 = vunpack.c.l.b16 %v129
    %v274 = vunpack.c.h.b16 %v129
    %v275 = vunpack.c.l.b16 %v130
    %v276 = vunpack.c.l.b16 %v131
    %v277 = vunpack.c.h.b16 %v131
    %v278 = vunpack.c.l.b16 %v132
    %v279 = vunpack.c.h.b16 %v132
    %v280 = vunpack.c.l.b16 %v133
    %v281 = vunpack.c.l.b16 %v134
    %v282 = vunpack.c.h.b16 %v134
    %v283 = vunpack.c.l.b16 %v135
    %v284 = vunpack.c.h.b16 %v135
    %v285 = vunpack.c.l.b16 %v136
    %v286 = vunpack.c.l.b16 %v137
    %v287 = vunpack.c.h.b16 %v137
    %v288 = vunpack.c.l.b16 %v138
    %v289 = vunpack.c.h.b16 %v138
    %v290 = vunpack.c.l.b16 %v139
    %v291 = vunpack.c.l.b16 %v140
    %v292 = vunpack.c.h.b16 %v140
    %v293 = vunpack.c.l.b16 %v141
    %v294 = vunpack.c.h.b16 %v141
    %v295 = vunpack.c.l.b16 %v142
    %v296 = vunpack.c.l.b16 %v143
    %v297 = vunpack.c.h.b16 %v143
    %v298 = vunpack.c.l.b16 %v144
    %v299 = vunpack.c.h.b16 %v144
    %v300 = vunpack.c.l.b16 %v145
    %v301 = vpack.c.b16 %v226, %v221
    %v302 = vpack.c.b16 %v227, %v222
    %v303 = vpack.c.b16 %v228, %v223
    %v304 = vpack.c.b16 %v229, %v224
    %v305 = vpack.c.b16 %v230, %v225
    %v306 = vpack.c.b16 %v236, %v231
    %v307 = vpack.c.b16 %v237, %v232
    %v308 = vpack.c.b16 %v238, %v233
    %v309 = vpack.c.b16 %v239, %v234
    %v310 = vpack.c.b16 %v240, %v235
    %v311 = vpack.c.b16 %v246, %v241
    %v312 = vpack.c.b16 %v247, %v242
    %v313 = vpack.c.b16 %v248, %v243
    %v314 = vpack.c.b16 %v249, %v244
    %v315 = vpack.c.b16 %v250, %v245
    %v316 = vpack.c.b16 %v256, %v251
    %v317 = vpack.c.b16 %v257, %v252
    %v318 = vpack.c.b16 %v258, %v253
    %v319 = vpack.c.b16 %v259, %v254
    %v320 = vpack.c.b16 %v260, %v255
    %v321 = vpack.c.b16 %v266, %v261
    %v322 = vpack.c.b16 %v267, %v262
    %v323 = vpack.c.b16 %v268, %v263
    %v324 = vpack.c.b16 %v269, %v264
    %v325 = vpack.c.b16 %v270, %v265
    %v326 = vpack.c.b16 %v276, %v271
    %v327 = vpack.c.b16 %v277, %v272
    %v328 = vpack.c.b16 %v278, %v273
    %v329 = vpack.c.b16 %v279, %v274
    %v330 = vpack.c.b16 %v280, %v275
    %v331 = vpack.c.b16 %v286, %v281
    %v332 = vpack.c.b16 %v287, %v282
    %v333 = vpack.c.b16 %v288, %v283
    %v334 = vpack.c.b16 %v289, %v284
    %v335 = vpack.c.b16 %v290, %v285
    %v336 = vpack.c.b16 %v296, %v291
    %v337 = vpack.c.b16 %v297, %v292
    %v338 = vpack.c.b16 %v298, %v293
    %v339 = vpack.c.b16 %v299, %v294
    %v340 = vpack.c.b16 %v300, %v295
    %381 = vmatprep.subr.bf16.mxu0 %v302
    %382 = vmatpush1.bf16.msra.mxu0 %v301
    %383 = vmatprep.subr.bf16.mxu0 %v307
    %384 = vmatpush1.bf16.msra.mxu0 %v306
    %385 = vmatprep.subr.bf16.mxu0 %v312
    %386 = vmatpush1.bf16.msra.mxu0 %v311
    %387 = vmatprep.subr.bf16.mxu0 %v317
    %388 = vmatpush1.bf16.msra.mxu0 %v316
    %389 = vmatprep.subr.bf16.mxu0 %v322
    %390 = vmatpush1.bf16.msra.mxu0 %v321
    %391 = vmatprep.subr.bf16.mxu0 %v327
    %392 = vmatpush1.bf16.msra.mxu0 %v326
    %393 = vmatprep.subr.bf16.mxu0 %v332
    %394 = vmatpush1.bf16.msra.mxu0 %v331
    %395 = vmatprep.subr.bf16.mxu0 %v337
    %396 = vmatpush1.bf16.msra.mxu0 %v336
    %397 = vmatprep.subr.bf16.mxu0 0
    %398 = vmatpush1.bf16.msra.mxu0 0
    %399 = vmatprep.subr.bf16.mxu0 0
    %400 = vmatpush1.bf16.msra.mxu0 0
    %401 = vmatprep.subr.bf16.mxu0 0
    %402 = vmatpush1.bf16.msra.mxu0 0
    %403 = vmatprep.subr.bf16.mxu0 0
    %404 = vmatpush1.bf16.msra.mxu0 0
    %405 = vmatprep.subr.bf16.mxu0 0
    %406 = vmatpush1.bf16.msra.mxu0 0
    %407 = vmatprep.subr.bf16.mxu0 0
    %408 = vmatpush1.bf16.msra.mxu0 0
    %409 = vmatprep.subr.bf16.mxu0 0
    %410 = vmatpush1.bf16.msra.mxu0 0
    %411 = vmatprep.subr.bf16.mxu0 0
    %412 = vmatpush1.bf16.msra.mxu0 0
    %413 = vmatprep.mubr.bf16.mxu0 0
    %414 = vmatmul.mubr.bf16.gmra.mrb[0].mxu0 %v97
    %v415 = vpop.f32.mrb[0].mxu0
    %v416 = vadd.f32 %v151, %v415
    %v417 = vpop.f32.mrb[0].mxu0
    %v418 = vadd.f32 %v155, %v417
    %v419 = vpop.f32.mrb[0].mxu0
    %v420 = vpop.f32.mrb[0].mxu0
    %421 = vdwg.mxu0
    %422 = vmatprep.subr.bf16.mxu0 %v304
    %423 = vmatpush1.bf16.msra.mxu0 %v303
    %424 = vmatprep.subr.bf16.mxu0 %v309
    %425 = vmatpush1.bf16.msra.mxu0 %v308
    %426 = vmatprep.subr.bf16.mxu0 %v314
    %427 = vmatpush1.bf16.msra.mxu0 %v313
    %428 = vmatprep.subr.bf16.mxu0 %v319
    %429 = vmatpush1.bf16.msra.mxu0 %v318
    %430 = vmatprep.subr.bf16.mxu0 %v324
    %431 = vmatpush1.bf16.msra.mxu0 %v323
    %432 = vmatprep.subr.bf16.mxu0 %v329
    %433 = vmatpush1.bf16.msra.mxu0 %v328
    %434 = vmatprep.subr.bf16.mxu0 %v334
    %435 = vmatpush1.bf16.msra.mxu0 %v333
    %436 = vmatprep.subr.bf16.mxu0 %v339
    %437 = vmatpush1.bf16.msra.mxu0 %v338
    %438 = vmatprep.subr.bf16.mxu0 0
    %439 = vmatpush1.bf16.msra.mxu0 0
    %440 = vmatprep.subr.bf16.mxu0 0
    %441 = vmatpush1.bf16.msra.mxu0 0
    %442 = vmatprep.subr.bf16.mxu0 0
    %443 = vmatpush1.bf16.msra.mxu0 0
    %444 = vmatprep.subr.bf16.mxu0 0
    %445 = vmatpush1.bf16.msra.mxu0 0
    %446 = vmatprep.subr.bf16.mxu0 0
    %447 = vmatpush1.bf16.msra.mxu0 0
    %448 = vmatprep.subr.bf16.mxu0 0
    %449 = vmatpush1.bf16.msra.mxu0 0
    %450 = vmatprep.subr.bf16.mxu0 0
    %451 = vmatpush1.bf16.msra.mxu0 0
    %452 = vmatprep.subr.bf16.mxu0 0
    %453 = vmatpush1.bf16.msra.mxu0 0
    %454 = vmatprep.mubr.bf16.mxu0 0
    %455 = vmatmul.mubr.bf16.gmra.mrb[0].mxu0 %v97
    %v456 = vpop.f32.mrb[0].mxu0
    %v457 = vadd.f32 %v159, %v456
    %v458 = vpop.f32.mrb[0].mxu0
    %v459 = vadd.f32 %v163, %v458
    %v460 = vpop.f32.mrb[0].mxu0
    %v461 = vpop.f32.mrb[0].mxu0
    %462 = vdwg.mxu0
    %463 = vmatprep.subr.bf16.mxu0 0
    %464 = vmatpush1.bf16.msra.mxu0 %v305
    %465 = vmatprep.subr.bf16.mxu0 0
    %466 = vmatpush1.bf16.msra.mxu0 %v310
    %467 = vmatprep.subr.bf16.mxu0 0
    %468 = vmatpush1.bf16.msra.mxu0 %v315
    %469 = vmatprep.subr.bf16.mxu0 0
    %470 = vmatpush1.bf16.msra.mxu0 %v320
    %471 = vmatprep.subr.bf16.mxu0 0
    %472 = vmatpush1.bf16.msra.mxu0 %v325
    %473 = vmatprep.subr.bf16.mxu0 0
    %474 = vmatpush1.bf16.msra.mxu0 %v330
    %475 = vmatprep.subr.bf16.mxu0 0
    %476 = vmatpush1.bf16.msra.mxu0 %v335
    %477 = vmatprep.subr.bf16.mxu0 0
    %478 = vmatpush1.bf16.msra.mxu0 %v340
    %479 = vmatprep.subr.bf16.mxu0 0
    %480 = vmatpush1.bf16.msra.mxu0 0
    %481 = vmatprep.subr.bf16.mxu0 0
    %482 = vmatpush1.bf16.msra.mxu0 0
    %483 = vmatprep.subr.bf16.mxu0 0
    %484 = vmatpush1.bf16.msra.mxu0 0
    %485 = vmatprep.subr.bf16.mxu0 0
    %486 = vmatpush1.bf16.msra.mxu0 0
    %487 = vmatprep.subr.bf16.mxu0 0
    %488 = vmatpush1.bf16.msra.mxu0 0
    %489 = vmatprep.subr.bf16.mxu0 0
    %490 = vmatpush1.bf16.msra.mxu0 0
    %491 = vmatprep.subr.bf16.mxu0 0
    %492 = vmatpush1.bf16.msra.mxu0 0
    %493 = vmatprep.subr.bf16.mxu0 0
    %494 = vmatpush1.bf16.msra.mxu0 0
    %495 = vmatprep.mubr.bf16.mxu0 0
    %496 = vmatmul.mubr.bf16.gmra.mrb[0].mxu0 %v97
    %v497 = vpop.f32.mrb[0].mxu0
    %v498 = vadd.f32 %v167, %v497
    %v499 = vpop.f32.mrb[0].mxu0
    %v500 = vpop.f32.mrb[0].mxu0
    %v501 = vpop.f32.mrb[0].mxu0
    %502 = vdwg.mxu0
    %v503 = vpack.c.bf16 %v416, %v416
    %v504 = vpack.c.bf16 %v418, %v418
    %v505 = vpack.c.bf16 %v457, %v457
    %v506 = vpack.c.bf16 %v459, %v459
    %v507 = vpack.c.bf16 %v498, %v498
    %v508 = vtanh.bf16.pop %v503
    %v509 = vtanh.bf16.pop %v504
    %v510 = vtanh.bf16.pop %v505
    %v511 = vtanh.bf16.pop %v506
    %v512 = vtanh.bf16.pop %v507
    %v513 = vld [vmem:[#allocation7] sm:$0xff]
    %v514 = vld [vmem:[#allocation7 + $0x8] sm:$0xff]
    %v515 = vld [vmem:[#allocation7 + $0x10] sm:$0xf]
    %v516 = vld [vmem:[#allocation7 + $0x14] sm:$0xff]
    %v517 = vld [vmem:[#allocation7 + $0x1c] sm:$0xff]
    %v518 = vld [vmem:[#allocation7 + $0x24] sm:$0xf]
    %v519 = vld [vmem:[#allocation7 + $0x28] sm:$0xff]
    %v520 = vld [vmem:[#allocation7 + $0x30] sm:$0xff]
    %v521 = vld [vmem:[#allocation7 + $0x38] sm:$0xf]
    %v522 = vld [vmem:[#allocation7 + $0x3c] sm:$0xff]
    %v523 = vld [vmem:[#allocation7 + $0x44] sm:$0xff]
    %v524 = vld [vmem:[#allocation7 + $0x4c] sm:$0xf]
    %v525 = vld [vmem:[#allocation7 + $0x50] sm:$0xff]
    %v526 = vld [vmem:[#allocation7 + $0x58] sm:$0xff]
    %v527 = vld [vmem:[#allocation7 + $0x60] sm:$0xf]
    %v528 = vld [vmem:[#allocation7 + $0x64] sm:$0xff]
    %v529 = vld [vmem:[#allocation7 + $0x6c] sm:$0xff]
    %v530 = vld [vmem:[#allocation7 + $0x74] sm:$0xf]
    %v531 = vld [vmem:[#allocation7 + $0x78] sm:$0xff]
    %v532 = vld [vmem:[#allocation7 + $0x80] sm:$0xff]
    %v533 = vld [vmem:[#allocation7 + $0x88] sm:$0xf]
    %v534 = vld [vmem:[#allocation7 + $0x8c] sm:$0xff]
    %v535 = vld [vmem:[#allocation7 + $0x94] sm:$0xff]
    %v536 = vld [vmem:[#allocation7 + $0x9c] sm:$0xf]
    %v537 = vld [vmem:[#allocation7 + $0xa0] sm:$0xff]
    %v538 = vld [vmem:[#allocation7 + $0xa8] sm:$0xff]
    %v539 = vld [vmem:[#allocation7 + $0xb0] sm:$0xf]
    %v540 = vld [vmem:[#allocation7 + $0xb4] sm:$0xff]
    %v541 = vld [vmem:[#allocation7 + $0xbc] sm:$0xff]
    %v542 = vld [vmem:[#allocation7 + $0xc4] sm:$0xf]
    %v543 = vld [vmem:[#allocation7 + $0xc8] sm:$0xff]
    %v544 = vld [vmem:[#allocation7 + $0xd0] sm:$0xff]
    %v545 = vld [vmem:[#allocation7 + $0xd8] sm:$0xf]
    %v546 = vld [vmem:[#allocation7 + $0xdc] sm:$0xff]
    %v547 = vld [vmem:[#allocation7 + $0xe4] sm:$0xff]
    %v548 = vld [vmem:[#allocation7 + $0xec] sm:$0xf]
    %v549 = vld [vmem:[#allocation7 + $0xf0] sm:$0xff]
    %v550 = vld [vmem:[#allocation7 + $0xf8] sm:$0xff]
    %v551 = vld [vmem:[#allocation7 + $0x100] sm:$0xf]
    %v552 = vld [vmem:[#allocation7 + $0x104] sm:$0xff]
    %v553 = vld [vmem:[#allocation7 + $0x10c] sm:$0xff]
    %v554 = vld [vmem:[#allocation7 + $0x114] sm:$0xf]
    %v555 = vld [vmem:[#allocation7 + $0x118] sm:$0xff]
    %v556 = vld [vmem:[#allocation7 + $0x120] sm:$0xff]
    %v557 = vld [vmem:[#allocation7 + $0x128] sm:$0xf]
    %v558 = vld [vmem:[#allocation7 + $0x12c] sm:$0xff]
    %v559 = vld [vmem:[#allocation7 + $0x134] sm:$0xff]
    %v560 = vld [vmem:[#allocation7 + $0x13c] sm:$0xf]
    %v561 = vld [vmem:[#allocation7 + $0x140] sm:$0xff]
    %v562 = vld [vmem:[#allocation7 + $0x148] sm:$0xff]
    %v563 = vld [vmem:[#allocation7 + $0x150] sm:$0xf]
    %v564 = vld [vmem:[#allocation7 + $0x154] sm:$0xff]
    %v565 = vld [vmem:[#allocation7 + $0x15c] sm:$0xff]
    %v566 = vld [vmem:[#allocation7 + $0x164] sm:$0xf]
    %v567 = vld [vmem:[#allocation7 + $0x168] sm:$0xff]
    %v568 = vld [vmem:[#allocation7 + $0x170] sm:$0xff]
    %v569 = vld [vmem:[#allocation7 + $0x178] sm:$0xf]
    %v570 = vld [vmem:[#allocation7 + $0x17c] sm:$0xff]
    %v571 = vld [vmem:[#allocation7 + $0x184] sm:$0xff]
    %v572 = vld [vmem:[#allocation7 + $0x18c] sm:$0xf]
    %v573 = vld [vmem:[#allocation7 + $0x190] sm:$0xff]
    %v574 = vld [vmem:[#allocation7 + $0x198] sm:$0xff]
    %v575 = vld [vmem:[#allocation7 + $0x1a0] sm:$0xf]
    %v576 = vld [vmem:[#allocation7 + $0x1a4] sm:$0xff]
    %v577 = vld [vmem:[#allocation7 + $0x1ac] sm:$0xff]
    %v578 = vld [vmem:[#allocation7 + $0x1b4] sm:$0xf]
    %v579 = vld [vmem:[#allocation7 + $0x1b8] sm:$0xff]
    %v580 = vld [vmem:[#allocation7 + $0x1c0] sm:$0xff]
    %v581 = vld [vmem:[#allocation7 + $0x1c8] sm:$0xf]
    %v582 = vld [vmem:[#allocation7 + $0x1cc] sm:$0xff]
    %v583 = vld [vmem:[#allocation7 + $0x1d4] sm:$0xff]
    %v584 = vld [vmem:[#allocation7 + $0x1dc] sm:$0xf]
    %v585 = vld [vmem:[#allocation7 + $0x1e0] sm:$0xff]
    %v586 = vld [vmem:[#allocation7 + $0x1e8] sm:$0xff]
    %v587 = vld [vmem:[#allocation7 + $0x1f0] sm:$0xf]
    %v588 = vld [vmem:[#allocation7 + $0x1f4] sm:$0xff]
    %v589 = vld [vmem:[#allocation7 + $0x1fc] sm:$0xff]
    %v590 = vld [vmem:[#allocation7 + $0x204] sm:$0xf]
    %v591 = vld [vmem:[#allocation7 + $0x208] sm:$0xff]
    %v592 = vld [vmem:[#allocation7 + $0x210] sm:$0xff]
    %v593 = vld [vmem:[#allocation7 + $0x218] sm:$0xf]
    %v594 = vld [vmem:[#allocation7 + $0x21c] sm:$0xff]
    %v595 = vld [vmem:[#allocation7 + $0x224] sm:$0xff]
    %v596 = vld [vmem:[#allocation7 + $0x22c] sm:$0xf]
    %v597 = vld [vmem:[#allocation7 + $0x230] sm:$0xff]
    %v598 = vld [vmem:[#allocation7 + $0x238] sm:$0xff]
    %v599 = vld [vmem:[#allocation7 + $0x240] sm:$0xf]
    %v600 = vld [vmem:[#allocation7 + $0x244] sm:$0xff]
    %v601 = vld [vmem:[#allocation7 + $0x24c] sm:$0xff]
    %v602 = vld [vmem:[#allocation7 + $0x254] sm:$0xf]
    %v603 = vld [vmem:[#allocation7 + $0x258] sm:$0xff]
    %v604 = vld [vmem:[#allocation7 + $0x260] sm:$0xff]
    %v605 = vld [vmem:[#allocation7 + $0x268] sm:$0xf]
    %v606 = vld [vmem:[#allocation7 + $0x26c] sm:$0xff]
    %v607 = vld [vmem:[#allocation7 + $0x274] sm:$0xff]
    %v608 = vld [vmem:[#allocation7 + $0x27c] sm:$0xf]
    %v609 = vld [vmem:[#allocation7 + $0x280] sm:$0xff]
    %v610 = vld [vmem:[#allocation7 + $0x288] sm:$0xff]
    %v611 = vld [vmem:[#allocation7 + $0x290] sm:$0xf]
    %v612 = vld [vmem:[#allocation7 + $0x294] sm:$0xff]
    %v613 = vld [vmem:[#allocation7 + $0x29c] sm:$0xff]
    %v614 = vld [vmem:[#allocation7 + $0x2a4] sm:$0xf]
    %v615 = vld [vmem:[#allocation7 + $0x2a8] sm:$0xff]
    %v616 = vld [vmem:[#allocation7 + $0x2b0] sm:$0xff]
    %v617 = vld [vmem:[#allocation7 + $0x2b8] sm:$0xf]
    %v618 = vld [vmem:[#allocation7 + $0x2bc] sm:$0xff]
    %v619 = vld [vmem:[#allocation7 + $0x2c4] sm:$0xff]
    %v620 = vld [vmem:[#allocation7 + $0x2cc] sm:$0xf]
    %v621 = vld [vmem:[#allocation7 + $0x2d0] sm:$0xff]
    %v622 = vld [vmem:[#allocation7 + $0x2d8] sm:$0xff]
    %v623 = vld [vmem:[#allocation7 + $0x2e0] sm:$0xf]
    %v624 = vld [vmem:[#allocation7 + $0x2e4] sm:$0xff]
    %v625 = vld [vmem:[#allocation7 + $0x2ec] sm:$0xff]
    %v626 = vld [vmem:[#allocation7 + $0x2f4] sm:$0xf]
    %v627 = vld [vmem:[#allocation7 + $0x2f8] sm:$0xff]
    %v628 = vld [vmem:[#allocation7 + $0x300] sm:$0xff]
    %v629 = vld [vmem:[#allocation7 + $0x308] sm:$0xf]
    %v630 = vld [vmem:[#allocation7 + $0x30c] sm:$0xff]
    %v631 = vld [vmem:[#allocation7 + $0x314] sm:$0xff]
    %v632 = vld [vmem:[#allocation7 + $0x31c] sm:$0xf]
    %v633 = vld [vmem:[#allocation7 + $0x320] sm:$0xff]
    %v634 = vld [vmem:[#allocation7 + $0x328] sm:$0xff]
    %v635 = vld [vmem:[#allocation7 + $0x330] sm:$0xf]
    %v636 = vld [vmem:[#allocation7 + $0x334] sm:$0xff]
    %v637 = vld [vmem:[#allocation7 + $0x33c] sm:$0xff]
    %v638 = vld [vmem:[#allocation7 + $0x344] sm:$0xf]
    %v639 = vld [vmem:[#allocation7 + $0x348] sm:$0xff]
    %v640 = vld [vmem:[#allocation7 + $0x350] sm:$0xff]
    %v641 = vld [vmem:[#allocation7 + $0x358] sm:$0xf]
    %v642 = vld [vmem:[#allocation7 + $0x35c] sm:$0xff]
    %v643 = vld [vmem:[#allocation7 + $0x364] sm:$0xff]
    %v644 = vld [vmem:[#allocation7 + $0x36c] sm:$0xf]
    %v645 = vld [vmem:[#allocation7 + $0x370] sm:$0xff]
    %v646 = vld [vmem:[#allocation7 + $0x378] sm:$0xff]
    %v647 = vld [vmem:[#allocation7 + $0x380] sm:$0xf]
    %v648 = vld [vmem:[#allocation7 + $0x384] sm:$0xff]
    %v649 = vld [vmem:[#allocation7 + $0x38c] sm:$0xff]
    %v650 = vld [vmem:[#allocation7 + $0x394] sm:$0xf]
    %v651 = vld [vmem:[#allocation7 + $0x398] sm:$0xff]
    %v652 = vld [vmem:[#allocation7 + $0x3a0] sm:$0xff]
    %v653 = vld [vmem:[#allocation7 + $0x3a8] sm:$0xf]
    %v654 = vld [vmem:[#allocation7 + $0x3ac] sm:$0xff]
    %v655 = vld [vmem:[#allocation7 + $0x3b4] sm:$0xff]
    %v656 = vld [vmem:[#allocation7 + $0x3bc] sm:$0xf]
    %v657 = vld [vmem:[#allocation7 + $0x3c0] sm:$0xff]
    %v658 = vld [vmem:[#allocation7 + $0x3c8] sm:$0xff]
    %v659 = vld [vmem:[#allocation7 + $0x3d0] sm:$0xf]
    %v660 = vld [vmem:[#allocation7 + $0x3d4] sm:$0xff]
    %v661 = vld [vmem:[#allocation7 + $0x3dc] sm:$0xff]
    %v662 = vld [vmem:[#allocation7 + $0x3e4] sm:$0xf]
    %v663 = vld [vmem:[#allocation7 + $0x3e8] sm:$0xff]
    %v664 = vld [vmem:[#allocation7 + $0x3f0] sm:$0xff]
    %v665 = vld [vmem:[#allocation7 + $0x3f8] sm:$0xf]
    %v666 = vld [vmem:[#allocation7 + $0x3fc] sm:$0xff]
    %v667 = vld [vmem:[#allocation7 + $0x404] sm:$0xff]
    %v668 = vld [vmem:[#allocation7 + $0x40c] sm:$0xf]
    %v669 = vld [vmem:[#allocation7 + $0x410] sm:$0xff]
    %v670 = vld [vmem:[#allocation7 + $0x418] sm:$0xff]
    %v671 = vld [vmem:[#allocation7 + $0x420] sm:$0xf]
    %v672 = vld [vmem:[#allocation7 + $0x424] sm:$0xff]
    %v673 = vld [vmem:[#allocation7 + $0x42c] sm:$0xff]
    %v674 = vld [vmem:[#allocation7 + $0x434] sm:$0xf]
    %v675 = vld [vmem:[#allocation7 + $0x438] sm:$0xff]
    %v676 = vld [vmem:[#allocation7 + $0x440] sm:$0xff]
    %v677 = vld [vmem:[#allocation7 + $0x448] sm:$0xf]
    %v678 = vld [vmem:[#allocation7 + $0x44c] sm:$0xff]
    %v679 = vld [vmem:[#allocation7 + $0x454] sm:$0xff]
    %v680 = vld [vmem:[#allocation7 + $0x45c] sm:$0xf]
    %v681 = vld [vmem:[#allocation7 + $0x460] sm:$0xff]
    %v682 = vld [vmem:[#allocation7 + $0x468] sm:$0xff]
    %v683 = vld [vmem:[#allocation7 + $0x470] sm:$0xf]
    %v684 = vld [vmem:[#allocation7 + $0x474] sm:$0xff]
    %v685 = vld [vmem:[#allocation7 + $0x47c] sm:$0xff]
    %v686 = vld [vmem:[#allocation7 + $0x484] sm:$0xf]
    %v687 = vld [vmem:[#allocation7 + $0x488] sm:$0xff]
    %v688 = vld [vmem:[#allocation7 + $0x490] sm:$0xff]
    %v689 = vld [vmem:[#allocation7 + $0x498] sm:$0xf]
    %v690 = vld [vmem:[#allocation7 + $0x49c] sm:$0xff]
    %v691 = vld [vmem:[#allocation7 + $0x4a4] sm:$0xff]
    %v692 = vld [vmem:[#allocation7 + $0x4ac] sm:$0xf]
    %v693 = vld [vmem:[#allocation7 + $0x4b0] sm:$0xff]
    %v694 = vld [vmem:[#allocation7 + $0x4b8] sm:$0xff]
    %v695 = vld [vmem:[#allocation7 + $0x4c0] sm:$0xf]
    %v696 = vld [vmem:[#allocation7 + $0x4c4] sm:$0xff]
    %v697 = vld [vmem:[#allocation7 + $0x4cc] sm:$0xff]
    %v698 = vld [vmem:[#allocation7 + $0x4d4] sm:$0xf]
    %v699 = vld [vmem:[#allocation7 + $0x4d8] sm:$0xff]
    %v700 = vld [vmem:[#allocation7 + $0x4e0] sm:$0xff]
    %v701 = vld [vmem:[#allocation7 + $0x4e8] sm:$0xf]
    %v702 = vld [vmem:[#allocation7 + $0x4ec] sm:$0xff]
    %v703 = vld [vmem:[#allocation7 + $0x4f4] sm:$0xff]
    %v704 = vld [vmem:[#allocation7 + $0x4fc] sm:$0xf]
    %v705 = vld [vmem:[#allocation7 + $0x500] sm:$0xff]
    %v706 = vld [vmem:[#allocation7 + $0x508] sm:$0xff]
    %v707 = vld [vmem:[#allocation7 + $0x510] sm:$0xf]
    %v708 = vld [vmem:[#allocation7 + $0x514] sm:$0xff]
    %v709 = vld [vmem:[#allocation7 + $0x51c] sm:$0xff]
    %v710 = vld [vmem:[#allocation7 + $0x524] sm:$0xf]
    %v711 = vld [vmem:[#allocation7 + $0x528] sm:$0xff]
    %v712 = vld [vmem:[#allocation7 + $0x530] sm:$0xff]
    %v713 = vld [vmem:[#allocation7 + $0x538] sm:$0xf]
    %v714 = vld [vmem:[#allocation7 + $0x53c] sm:$0xff]
    %v715 = vld [vmem:[#allocation7 + $0x544] sm:$0xff]
    %v716 = vld [vmem:[#allocation7 + $0x54c] sm:$0xf]
    %v717 = vld [vmem:[#allocation7 + $0x550] sm:$0xff]
    %v718 = vld [vmem:[#allocation7 + $0x558] sm:$0xff]
    %v719 = vld [vmem:[#allocation7 + $0x560] sm:$0xf]
    %v720 = vld [vmem:[#allocation7 + $0x564] sm:$0xff]
    %v721 = vld [vmem:[#allocation7 + $0x56c] sm:$0xff]
    %v722 = vld [vmem:[#allocation7 + $0x574] sm:$0xf]
    %v723 = vld [vmem:[#allocation7 + $0x578] sm:$0xff]
    %v724 = vld [vmem:[#allocation7 + $0x580] sm:$0xff]
    %v725 = vld [vmem:[#allocation7 + $0x588] sm:$0xf]
    %v726 = vld [vmem:[#allocation7 + $0x58c] sm:$0xff]
    %v727 = vld [vmem:[#allocation7 + $0x594] sm:$0xff]
    %v728 = vld [vmem:[#allocation7 + $0x59c] sm:$0xf]
    %v729 = vld [vmem:[#allocation7 + $0x5a0] sm:$0xff]
    %v730 = vld [vmem:[#allocation7 + $0x5a8] sm:$0xff]
    %v731 = vld [vmem:[#allocation7 + $0x5b0] sm:$0xf]
    %v732 = vld [vmem:[#allocation7 + $0x5b4] sm:$0xff]
    %v733 = vld [vmem:[#allocation7 + $0x5bc] sm:$0xff]
    %v734 = vld [vmem:[#allocation7 + $0x5c4] sm:$0xf]
    %v735 = vld [vmem:[#allocation7 + $0x5c8] sm:$0xff]
    %v736 = vld [vmem:[#allocation7 + $0x5d0] sm:$0xff]
    %v737 = vld [vmem:[#allocation7 + $0x5d8] sm:$0xf]
    %v738 = vld [vmem:[#allocation7 + $0x5dc] sm:$0xff]
    %v739 = vld [vmem:[#allocation7 + $0x5e4] sm:$0xff]
    %v740 = vld [vmem:[#allocation7 + $0x5ec] sm:$0xf]
    %v741 = vld [vmem:[#allocation7 + $0x5f0] sm:$0xff]
    %v742 = vld [vmem:[#allocation7 + $0x5f8] sm:$0xff]
    %v743 = vld [vmem:[#allocation7 + $0x600] sm:$0xf]
    %v744 = vld [vmem:[#allocation7 + $0x604] sm:$0xff]
    %v745 = vld [vmem:[#allocation7 + $0x60c] sm:$0xff]
    %v746 = vld [vmem:[#allocation7 + $0x614] sm:$0xf]
    %v747 = vld [vmem:[#allocation7 + $0x618] sm:$0xff]
    %v748 = vld [vmem:[#allocation7 + $0x620] sm:$0xff]
    %v749 = vld [vmem:[#allocation7 + $0x628] sm:$0xf]
    %v750 = vld [vmem:[#allocation7 + $0x62c] sm:$0xff]
    %v751 = vld [vmem:[#allocation7 + $0x634] sm:$0xff]
    %v752 = vld [vmem:[#allocation7 + $0x63c] sm:$0xf]
    %v753 = vld [vmem:[%s4] sm:$0x1f]
    %v755 = vlaneseq
    %v756 = vshrl.u32 %v755, 7
    %v757 = vsub.s32 0, %v756
    %v758 = vrot.slane %v753, %v757
    %v759 = vlaneseq
    %v760 = vshrl.u32 %v759, 7
    %v761 = vsub.s32 1, %v760
    %v762 = vrot.slane %v753, %v761
    %v763 = vlaneseq
    %v764 = vshrl.u32 %v763, 7
    %v765 = vsub.s32 2, %v764
    %v766 = vrot.slane %v753, %v765
    %v767 = vlaneseq
    %v768 = vshrl.u32 %v767, 7
    %v769 = vsub.s32 3, %v768
    %v770 = vrot.slane %v753, %v769
    %v771 = vlaneseq
    %v772 = vshrl.u32 %v771, 7
    %v773 = vsub.s32 4, %v772
    %v774 = vrot.slane %v753, %v773
    %v1020 = vunpack.c.l.b16 %v513
    %v1021 = vunpack.c.h.b16 %v513
    %v1022 = vunpack.c.l.b16 %v514
    %v1023 = vunpack.c.h.b16 %v514
    %v1024 = vunpack.c.l.b16 %v515
    %v1025 = vunpack.c.l.b16 %v516
    %v1026 = vunpack.c.h.b16 %v516
    %v1027 = vunpack.c.l.b16 %v517
    %v1028 = vunpack.c.h.b16 %v517
    %v1029 = vunpack.c.l.b16 %v518
    %v1030 = vunpack.c.l.b16 %v519
    %v1031 = vunpack.c.h.b16 %v519
    %v1032 = vunpack.c.l.b16 %v520
    %v1033 = vunpack.c.h.b16 %v520
    %v1034 = vunpack.c.l.b16 %v521
    %v1035 = vunpack.c.l.b16 %v522
    %v1036 = vunpack.c.h.b16 %v522
    %v1037 = vunpack.c.l.b16 %v523
    %v1038 = vunpack.c.h.b16 %v523
    %v1039 = vunpack.c.l.b16 %v524
    %v1040 = vunpack.c.l.b16 %v525
    %v1041 = vunpack.c.h.b16 %v525
    %v1042 = vunpack.c.l.b16 %v526
    %v1043 = vunpack.c.h.b16 %v526
    %v1044 = vunpack.c.l.b16 %v527
    %v1045 = vunpack.c.l.b16 %v528
    %v1046 = vunpack.c.h.b16 %v528
    %v1047 = vunpack.c.l.b16 %v529
    %v1048 = vunpack.c.h.b16 %v529
    %v1049 = vunpack.c.l.b16 %v530
    %v1050 = vunpack.c.l.b16 %v531
    %v1051 = vunpack.c.h.b16 %v531
    %v1052 = vunpack.c.l.b16 %v532
    %v1053 = vunpack.c.h.b16 %v532
    %v1054 = vunpack.c.l.b16 %v533
    %v1055 = vunpack.c.l.b16 %v534
    %v1056 = vunpack.c.h.b16 %v534
    %v1057 = vunpack.c.l.b16 %v535
    %v1058 = vunpack.c.h.b16 %v535
    %v1059 = vunpack.c.l.b16 %v536
    %v1060 = vunpack.c.l.b16 %v537
    %v1061 = vunpack.c.h.b16 %v537
    %v1062 = vunpack.c.l.b16 %v538
    %v1063 = vunpack.c.h.b16 %v538
    %v1064 = vunpack.c.l.b16 %v539
    %v1065 = vunpack.c.l.b16 %v540
    %v1066 = vunpack.c.h.b16 %v540
    %v1067 = vunpack.c.l.b16 %v541
    %v1068 = vunpack.c.h.b16 %v541
    %v1069 = vunpack.c.l.b16 %v542
    %v1070 = vunpack.c.l.b16 %v543
    %v1071 = vunpack.c.h.b16 %v543
    %v1072 = vunpack.c.l.b16 %v544
    %v1073 = vunpack.c.h.b16 %v544
    %v1074 = vunpack.c.l.b16 %v545
    %v1075 = vunpack.c.l.b16 %v546
    %v1076 = vunpack.c.h.b16 %v546
    %v1077 = vunpack.c.l.b16 %v547
    %v1078 = vunpack.c.h.b16 %v547
    %v1079 = vunpack.c.l.b16 %v548
    %v1080 = vunpack.c.l.b16 %v549
    %v1081 = vunpack.c.h.b16 %v549
    %v1082 = vunpack.c.l.b16 %v550
    %v1083 = vunpack.c.h.b16 %v550
    %v1084 = vunpack.c.l.b16 %v551
    %v1085 = vunpack.c.l.b16 %v552
    %v1086 = vunpack.c.h.b16 %v552
    %v1087 = vunpack.c.l.b16 %v553
    %v1088 = vunpack.c.h.b16 %v553
    %v1089 = vunpack.c.l.b16 %v554
    %v1090 = vunpack.c.l.b16 %v555
    %v1091 = vunpack.c.h.b16 %v555
    %v1092 = vunpack.c.l.b16 %v556
    %v1093 = vunpack.c.h.b16 %v556
    %v1094 = vunpack.c.l.b16 %v557
    %v1095 = vunpack.c.l.b16 %v558
    %v1096 = vunpack.c.h.b16 %v558
    %v1097 = vunpack.c.l.b16 %v559
    %v1098 = vunpack.c.h.b16 %v559
    %v1099 = vunpack.c.l.b16 %v560
    %v1100 = vunpack.c.l.b16 %v561
    %v1101 = vunpack.c.h.b16 %v561
    %v1102 = vunpack.c.l.b16 %v562
    %v1103 = vunpack.c.h.b16 %v562
    %v1104 = vunpack.c.l.b16 %v563
    %v1105 = vunpack.c.l.b16 %v564
    %v1106 = vunpack.c.h.b16 %v564
    %v1107 = vunpack.c.l.b16 %v565
    %v1108 = vunpack.c.h.b16 %v565
    %v1109 = vunpack.c.l.b16 %v566
    %v1110 = vunpack.c.l.b16 %v567
    %v1111 = vunpack.c.h.b16 %v567
    %v1112 = vunpack.c.l.b16 %v568
    %v1113 = vunpack.c.h.b16 %v568
    %v1114 = vunpack.c.l.b16 %v569
    %v1115 = vunpack.c.l.b16 %v570
    %v1116 = vunpack.c.h.b16 %v570
    %v1117 = vunpack.c.l.b16 %v571
    %v1118 = vunpack.c.h.b16 %v571
    %v1119 = vunpack.c.l.b16 %v572
    %v1120 = vunpack.c.l.b16 %v573
    %v1121 = vunpack.c.h.b16 %v573
    %v1122 = vunpack.c.l.b16 %v574
    %v1123 = vunpack.c.h.b16 %v574
    %v1124 = vunpack.c.l.b16 %v575
    %v1125 = vunpack.c.l.b16 %v576
    %v1126 = vunpack.c.h.b16 %v576
    %v1127 = vunpack.c.l.b16 %v577
    %v1128 = vunpack.c.h.b16 %v577
    %v1129 = vunpack.c.l.b16 %v578
    %v1130 = vunpack.c.l.b16 %v579
    %v1131 = vunpack.c.h.b16 %v579
    %v1132 = vunpack.c.l.b16 %v580
    %v1133 = vunpack.c.h.b16 %v580
    %v1134 = vunpack.c.l.b16 %v581
    %v1135 = vunpack.c.l.b16 %v582
    %v1136 = vunpack.c.h.b16 %v582
    %v1137 = vunpack.c.l.b16 %v583
    %v1138 = vunpack.c.h.b16 %v583
    %v1139 = vunpack.c.l.b16 %v584
    %v1140 = vunpack.c.l.b16 %v585
    %v1141 = vunpack.c.h.b16 %v585
    %v1142 = vunpack.c.l.b16 %v586
    %v1143 = vunpack.c.h.b16 %v586
    %v1144 = vunpack.c.l.b16 %v587
    %v1145 = vunpack.c.l.b16 %v588
    %v1146 = vunpack.c.h.b16 %v588
    %v1147 = vunpack.c.l.b16 %v589
    %v1148 = vunpack.c.h.b16 %v589
    %v1149 = vunpack.c.l.b16 %v590
    %v1150 = vunpack.c.l.b16 %v591
    %v1151 = vunpack.c.h.b16 %v591
    %v1152 = vunpack.c.l.b16 %v592
    %v1153 = vunpack.c.h.b16 %v592
    %v1154 = vunpack.c.l.b16 %v593
    %v1155 = vunpack.c.l.b16 %v594
    %v1156 = vunpack.c.h.b16 %v594
    %v1157 = vunpack.c.l.b16 %v595
    %v1158 = vunpack.c.h.b16 %v595
    %v1159 = vunpack.c.l.b16 %v596
    %v1160 = vunpack.c.l.b16 %v597
    %v1161 = vunpack.c.h.b16 %v597
    %v1162 = vunpack.c.l.b16 %v598
    %v1163 = vunpack.c.h.b16 %v598
    %v1164 = vunpack.c.l.b16 %v599
    %v1165 = vunpack.c.l.b16 %v600
    %v1166 = vunpack.c.h.b16 %v600
    %v1167 = vunpack.c.l.b16 %v601
    %v1168 = vunpack.c.h.b16 %v601
    %v1169 = vunpack.c.l.b16 %v602
    %v1170 = vunpack.c.l.b16 %v603
    %v1171 = vunpack.c.h.b16 %v603
    %v1172 = vunpack.c.l.b16 %v604
    %v1173 = vunpack.c.h.b16 %v604
    %v1174 = vunpack.c.l.b16 %v605
    %v1175 = vunpack.c.l.b16 %v606
    %v1176 = vunpack.c.h.b16 %v606
    %v1177 = vunpack.c.l.b16 %v607
    %v1178 = vunpack.c.h.b16 %v607
    %v1179 = vunpack.c.l.b16 %v608
    %v1180 = vunpack.c.l.b16 %v609
    %v1181 = vunpack.c.h.b16 %v609
    %v1182 = vunpack.c.l.b16 %v610
    %v1183 = vunpack.c.h.b16 %v610
    %v1184 = vunpack.c.l.b16 %v611
    %v1185 = vunpack.c.l.b16 %v612
    %v1186 = vunpack.c.h.b16 %v612
    %v1187 = vunpack.c.l.b16 %v613
    %v1188 = vunpack.c.h.b16 %v613
    %v1189 = vunpack.c.l.b16 %v614
    %v1190 = vunpack.c.l.b16 %v615
    %v1191 = vunpack.c.h.b16 %v615
    %v1192 = vunpack.c.l.b16 %v616
    %v1193 = vunpack.c.h.b16 %v616
    %v1194 = vunpack.c.l.b16 %v617
    %v1195 = vunpack.c.l.b16 %v618
    %v1196 = vunpack.c.h.b16 %v618
    %v1197 = vunpack.c.l.b16 %v619
    %v1198 = vunpack.c.h.b16 %v619
    %v1199 = vunpack.c.l.b16 %v620
    %v1200 = vunpack.c.l.b16 %v621
    %v1201 = vunpack.c.h.b16 %v621
    %v1202 = vunpack.c.l.b16 %v622
    %v1203 = vunpack.c.h.b16 %v622
    %v1204 = vunpack.c.l.b16 %v623
    %v1205 = vunpack.c.l.b16 %v624
    %v1206 = vunpack.c.h.b16 %v624
    %v1207 = vunpack.c.l.b16 %v625
    %v1208 = vunpack.c.h.b16 %v625
    %v1209 = vunpack.c.l.b16 %v626
    %v1210 = vunpack.c.l.b16 %v627
    %v1211 = vunpack.c.h.b16 %v627
    %v1212 = vunpack.c.l.b16 %v628
    %v1213 = vunpack.c.h.b16 %v628
    %v1214 = vunpack.c.l.b16 %v629
    %v1215 = vunpack.c.l.b16 %v630
    %v1216 = vunpack.c.h.b16 %v630
    %v1217 = vunpack.c.l.b16 %v631
    %v1218 = vunpack.c.h.b16 %v631
    %v1219 = vunpack.c.l.b16 %v632
    %v1220 = vunpack.c.l.b16 %v633
    %v1221 = vunpack.c.h.b16 %v633
    %v1222 = vunpack.c.l.b16 %v634
    %v1223 = vunpack.c.h.b16 %v634
    %v1224 = vunpack.c.l.b16 %v635
    %v1225 = vunpack.c.l.b16 %v636
    %v1226 = vunpack.c.h.b16 %v636
    %v1227 = vunpack.c.l.b16 %v637
    %v1228 = vunpack.c.h.b16 %v637
    %v1229 = vunpack.c.l.b16 %v638
    %v1230 = vunpack.c.l.b16 %v639
    %v1231 = vunpack.c.h.b16 %v639
    %v1232 = vunpack.c.l.b16 %v640
    %v1233 = vunpack.c.h.b16 %v640
    %v1234 = vunpack.c.l.b16 %v641
    %v1235 = vunpack.c.l.b16 %v642
    %v1236 = vunpack.c.h.b16 %v642
    %v1237 = vunpack.c.l.b16 %v643
    %v1238 = vunpack.c.h.b16 %v643
    %v1239 = vunpack.c.l.b16 %v644
    %v1240 = vunpack.c.l.b16 %v645
    %v1241 = vunpack.c.h.b16 %v645
    %v1242 = vunpack.c.l.b16 %v646
    %v1243 = vunpack.c.h.b16 %v646
    %v1244 = vunpack.c.l.b16 %v647
    %v1245 = vunpack.c.l.b16 %v648
    %v1246 = vunpack.c.h.b16 %v648
    %v1247 = vunpack.c.l.b16 %v649
    %v1248 = vunpack.c.h.b16 %v649
    %v1249 = vunpack.c.l.b16 %v650
    %v1250 = vunpack.c.l.b16 %v651
    %v1251 = vunpack.c.h.b16 %v651
    %v1252 = vunpack.c.l.b16 %v652
    %v1253 = vunpack.c.h.b16 %v652
    %v1254 = vunpack.c.l.b16 %v653
    %v1255 = vunpack.c.l.b16 %v654
    %v1256 = vunpack.c.h.b16 %v654
    %v1257 = vunpack.c.l.b16 %v655
    %v1258 = vunpack.c.h.b16 %v655
    %v1259 = vunpack.c.l.b16 %v656
    %v1260 = vunpack.c.l.b16 %v657
    %v1261 = vunpack.c.h.b16 %v657
    %v1262 = vunpack.c.l.b16 %v658
    %v1263 = vunpack.c.h.b16 %v658
    %v1264 = vunpack.c.l.b16 %v659
    %v1265 = vunpack.c.l.b16 %v660
    %v1266 = vunpack.c.h.b16 %v660
    %v1267 = vunpack.c.l.b16 %v661
    %v1268 = vunpack.c.h.b16 %v661
    %v1269 = vunpack.c.l.b16 %v662
    %v1270 = vunpack.c.l.b16 %v663
    %v1271 = vunpack.c.h.b16 %v663
    %v1272 = vunpack.c.l.b16 %v664
    %v1273 = vunpack.c.h.b16 %v664
    %v1274 = vunpack.c.l.b16 %v665
    %v1275 = vunpack.c.l.b16 %v666
    %v1276 = vunpack.c.h.b16 %v666
    %v1277 = vunpack.c.l.b16 %v667
    %v1278 = vunpack.c.h.b16 %v667
    %v1279 = vunpack.c.l.b16 %v668
    %v1280 = vunpack.c.l.b16 %v669
    %v1281 = vunpack.c.h.b16 %v669
    %v1282 = vunpack.c.l.b16 %v670
    %v1283 = vunpack.c.h.b16 %v670
    %v1284 = vunpack.c.l.b16 %v671
    %v1285 = vunpack.c.l.b16 %v672
    %v1286 = vunpack.c.h.b16 %v672
    %v1287 = vunpack.c.l.b16 %v673
    %v1288 = vunpack.c.h.b16 %v673
    %v1289 = vunpack.c.l.b16 %v674
    %v1290 = vunpack.c.l.b16 %v675
    %v1291 = vunpack.c.h.b16 %v675
    %v1292 = vunpack.c.l.b16 %v676
    %v1293 = vunpack.c.h.b16 %v676
    %v1294 = vunpack.c.l.b16 %v677
    %v1295 = vunpack.c.l.b16 %v678
    %v1296 = vunpack.c.h.b16 %v678
    %v1297 = vunpack.c.l.b16 %v679
    %v1298 = vunpack.c.h.b16 %v679
    %v1299 = vunpack.c.l.b16 %v680
    %v1300 = vunpack.c.l.b16 %v681
    %v1301 = vunpack.c.h.b16 %v681
    %v1302 = vunpack.c.l.b16 %v682
    %v1303 = vunpack.c.h.b16 %v682
    %v1304 = vunpack.c.l.b16 %v683
    %v1305 = vunpack.c.l.b16 %v684
    %v1306 = vunpack.c.h.b16 %v684
    %v1307 = vunpack.c.l.b16 %v685
    %v1308 = vunpack.c.h.b16 %v685
    %v1309 = vunpack.c.l.b16 %v686
    %v1310 = vunpack.c.l.b16 %v687
    %v1311 = vunpack.c.h.b16 %v687
    %v1312 = vunpack.c.l.b16 %v688
    %v1313 = vunpack.c.h.b16 %v688
    %v1314 = vunpack.c.l.b16 %v689
    %v1315 = vunpack.c.l.b16 %v690
    %v1316 = vunpack.c.h.b16 %v690
    %v1317 = vunpack.c.l.b16 %v691
    %v1318 = vunpack.c.h.b16 %v691
    %v1319 = vunpack.c.l.b16 %v692
    %v1320 = vunpack.c.l.b16 %v693
    %v1321 = vunpack.c.h.b16 %v693
    %v1322 = vunpack.c.l.b16 %v694
    %v1323 = vunpack.c.h.b16 %v694
    %v1324 = vunpack.c.l.b16 %v695
    %v1325 = vunpack.c.l.b16 %v696
    %v1326 = vunpack.c.h.b16 %v696
    %v1327 = vunpack.c.l.b16 %v697
    %v1328 = vunpack.c.h.b16 %v697
    %v1329 = vunpack.c.l.b16 %v698
    %v1330 = vunpack.c.l.b16 %v699
    %v1331 = vunpack.c.h.b16 %v699
    %v1332 = vunpack.c.l.b16 %v700
    %v1333 = vunpack.c.h.b16 %v700
    %v1334 = vunpack.c.l.b16 %v701
    %v1335 = vunpack.c.l.b16 %v702
    %v1336 = vunpack.c.h.b16 %v702
    %v1337 = vunpack.c.l.b16 %v703
    %v1338 = vunpack.c.h.b16 %v703
    %v1339 = vunpack.c.l.b16 %v704
    %v1340 = vunpack.c.l.b16 %v705
    %v1341 = vunpack.c.h.b16 %v705
    %v1342 = vunpack.c.l.b16 %v706
    %v1343 = vunpack.c.h.b16 %v706
    %v1344 = vunpack.c.l.b16 %v707
    %v1345 = vunpack.c.l.b16 %v708
    %v1346 = vunpack.c.h.b16 %v708
    %v1347 = vunpack.c.l.b16 %v709
    %v1348 = vunpack.c.h.b16 %v709
    %v1349 = vunpack.c.l.b16 %v710
    %v1350 = vunpack.c.l.b16 %v711
    %v1351 = vunpack.c.h.b16 %v711
    %v1352 = vunpack.c.l.b16 %v712
    %v1353 = vunpack.c.h.b16 %v712
    %v1354 = vunpack.c.l.b16 %v713
    %v1355 = vunpack.c.l.b16 %v714
    %v1356 = vunpack.c.h.b16 %v714
    %v1357 = vunpack.c.l.b16 %v715
    %v1358 = vunpack.c.h.b16 %v715
    %v1359 = vunpack.c.l.b16 %v716
    %v1360 = vunpack.c.l.b16 %v717
    %v1361 = vunpack.c.h.b16 %v717
    %v1362 = vunpack.c.l.b16 %v718
    %v1363 = vunpack.c.h.b16 %v718
    %v1364 = vunpack.c.l.b16 %v719
    %v1365 = vunpack.c.l.b16 %v720
    %v1366 = vunpack.c.h.b16 %v720
    %v1367 = vunpack.c.l.b16 %v721
    %v1368 = vunpack.c.h.b16 %v721
    %v1369 = vunpack.c.l.b16 %v722
    %v1370 = vunpack.c.l.b16 %v723
    %v1371 = vunpack.c.h.b16 %v723
    %v1372 = vunpack.c.l.b16 %v724
    %v1373 = vunpack.c.h.b16 %v724
    %v1374 = vunpack.c.l.b16 %v725
    %v1375 = vunpack.c.l.b16 %v726
    %v1376 = vunpack.c.h.b16 %v726
    %v1377 = vunpack.c.l.b16 %v727
    %v1378 = vunpack.c.h.b16 %v727
    %v1379 = vunpack.c.l.b16 %v728
    %v1380 = vunpack.c.l.b16 %v729
    %v1381 = vunpack.c.h.b16 %v729
    %v1382 = vunpack.c.l.b16 %v730
    %v1383 = vunpack.c.h.b16 %v730
    %v1384 = vunpack.c.l.b16 %v731
    %v1385 = vunpack.c.l.b16 %v732
    %v1386 = vunpack.c.h.b16 %v732
    %v1387 = vunpack.c.l.b16 %v733
    %v1388 = vunpack.c.h.b16 %v733
    %v1389 = vunpack.c.l.b16 %v734
    %v1390 = vunpack.c.l.b16 %v735
    %v1391 = vunpack.c.h.b16 %v735
    %v1392 = vunpack.c.l.b16 %v736
    %v1393 = vunpack.c.h.b16 %v736
    %v1394 = vunpack.c.l.b16 %v737
    %v1395 = vunpack.c.l.b16 %v738
    %v1396 = vunpack.c.h.b16 %v738
    %v1397 = vunpack.c.l.b16 %v739
    %v1398 = vunpack.c.h.b16 %v739
    %v1399 = vunpack.c.l.b16 %v740
    %v1400 = vunpack.c.l.b16 %v741
    %v1401 = vunpack.c.h.b16 %v741
    %v1402 = vunpack.c.l.b16 %v742
    %v1403 = vunpack.c.h.b16 %v742
    %v1404 = vunpack.c.l.b16 %v743
    %v1405 = vunpack.c.l.b16 %v744
    %v1406 = vunpack.c.h.b16 %v744
    %v1407 = vunpack.c.l.b16 %v745
    %v1408 = vunpack.c.h.b16 %v745
    %v1409 = vunpack.c.l.b16 %v746
    %v1410 = vunpack.c.l.b16 %v747
    %v1411 = vunpack.c.h.b16 %v747
    %v1412 = vunpack.c.l.b16 %v748
    %v1413 = vunpack.c.h.b16 %v748
    %v1414 = vunpack.c.l.b16 %v749
    %v1415 = vunpack.c.l.b16 %v750
    %v1416 = vunpack.c.h.b16 %v750
    %v1417 = vunpack.c.l.b16 %v751
    %v1418 = vunpack.c.h.b16 %v751
    %v1419 = vunpack.c.l.b16 %v752
    %v1420 = vpack.c.b16 %v1025, %v1020
    %v1421 = vpack.c.b16 %v1026, %v1021
    %v1422 = vpack.c.b16 %v1027, %v1022
    %v1423 = vpack.c.b16 %v1028, %v1023
    %v1424 = vpack.c.b16 %v1029, %v1024
    %v1425 = vpack.c.b16 %v1035, %v1030
    %v1426 = vpack.c.b16 %v1036, %v1031
    %v1427 = vpack.c.b16 %v1037, %v1032
    %v1428 = vpack.c.b16 %v1038, %v1033
    %v1429 = vpack.c.b16 %v1039, %v1034
    %v1430 = vpack.c.b16 %v1045, %v1040
    %v1431 = vpack.c.b16 %v1046, %v1041
    %v1432 = vpack.c.b16 %v1047, %v1042
    %v1433 = vpack.c.b16 %v1048, %v1043
    %v1434 = vpack.c.b16 %v1049, %v1044
    %v1435 = vpack.c.b16 %v1055, %v1050
    %v1436 = vpack.c.b16 %v1056, %v1051
    %v1437 = vpack.c.b16 %v1057, %v1052
    %v1438 = vpack.c.b16 %v1058, %v1053
    %v1439 = vpack.c.b16 %v1059, %v1054
    %v1440 = vpack.c.b16 %v1065, %v1060
    %v1441 = vpack.c.b16 %v1066, %v1061
    %v1442 = vpack.c.b16 %v1067, %v1062
    %v1443 = vpack.c.b16 %v1068, %v1063
    %v1444 = vpack.c.b16 %v1069, %v1064
    %v1445 = vpack.c.b16 %v1075, %v1070
    %v1446 = vpack.c.b16 %v1076, %v1071
    %v1447 = vpack.c.b16 %v1077, %v1072
    %v1448 = vpack.c.b16 %v1078, %v1073
    %v1449 = vpack.c.b16 %v1079, %v1074
    %v1450 = vpack.c.b16 %v1085, %v1080
    %v1451 = vpack.c.b16 %v1086, %v1081
    %v1452 = vpack.c.b16 %v1087, %v1082
    %v1453 = vpack.c.b16 %v1088, %v1083
    %v1454 = vpack.c.b16 %v1089, %v1084
    %v1455 = vpack.c.b16 %v1095, %v1090
    %v1456 = vpack.c.b16 %v1096, %v1091
    %v1457 = vpack.c.b16 %v1097, %v1092
    %v1458 = vpack.c.b16 %v1098, %v1093
    %v1459 = vpack.c.b16 %v1099, %v1094
    %v1460 = vpack.c.b16 %v1105, %v1100
    %v1461 = vpack.c.b16 %v1106, %v1101
    %v1462 = vpack.c.b16 %v1107, %v1102
    %v1463 = vpack.c.b16 %v1108, %v1103
    %v1464 = vpack.c.b16 %v1109, %v1104
    %v1465 = vpack.c.b16 %v1115, %v1110
    %v1466 = vpack.c.b16 %v1116, %v1111
    %v1467 = vpack.c.b16 %v1117, %v1112
    %v1468 = vpack.c.b16 %v1118, %v1113
    %v1469 = vpack.c.b16 %v1119, %v1114
    %v1470 = vpack.c.b16 %v1125, %v1120
    %v1471 = vpack.c.b16 %v1126, %v1121
    %v1472 = vpack.c.b16 %v1127, %v1122
    %v1473 = vpack.c.b16 %v1128, %v1123
    %v1474 = vpack.c.b16 %v1129, %v1124
    %v1475 = vpack.c.b16 %v1135, %v1130
    %v1476 = vpack.c.b16 %v1136, %v1131
    %v1477 = vpack.c.b16 %v1137, %v1132
    %v1478 = vpack.c.b16 %v1138, %v1133
    %v1479 = vpack.c.b16 %v1139, %v1134
    %v1480 = vpack.c.b16 %v1145, %v1140
    %v1481 = vpack.c.b16 %v1146, %v1141
    %v1482 = vpack.c.b16 %v1147, %v1142
    %v1483 = vpack.c.b16 %v1148, %v1143
    %v1484 = vpack.c.b16 %v1149, %v1144
    %v1485 = vpack.c.b16 %v1155, %v1150
    %v1486 = vpack.c.b16 %v1156, %v1151
    %v1487 = vpack.c.b16 %v1157, %v1152
    %v1488 = vpack.c.b16 %v1158, %v1153
    %v1489 = vpack.c.b16 %v1159, %v1154
    %v1490 = vpack.c.b16 %v1165, %v1160
    %v1491 = vpack.c.b16 %v1166, %v1161
    %v1492 = vpack.c.b16 %v1167, %v1162
    %v1493 = vpack.c.b16 %v1168, %v1163
    %v1494 = vpack.c.b16 %v1169, %v1164
    %v1495 = vpack.c.b16 %v1175, %v1170
    %v1496 = vpack.c.b16 %v1176, %v1171
    %v1497 = vpack.c.b16 %v1177, %v1172
    %v1498 = vpack.c.b16 %v1178, %v1173
    %v1499 = vpack.c.b16 %v1179, %v1174
    %v1500 = vpack.c.b16 %v1185, %v1180
    %v1501 = vpack.c.b16 %v1186, %v1181
    %v1502 = vpack.c.b16 %v1187, %v1182
    %v1503 = vpack.c.b16 %v1188, %v1183
    %v1504 = vpack.c.b16 %v1189, %v1184
    %v1505 = vpack.c.b16 %v1195, %v1190
    %v1506 = vpack.c.b16 %v1196, %v1191
    %v1507 = vpack.c.b16 %v1197, %v1192
    %v1508 = vpack.c.b16 %v1198, %v1193
    %v1509 = vpack.c.b16 %v1199, %v1194
    %v1510 = vpack.c.b16 %v1205, %v1200
    %v1511 = vpack.c.b16 %v1206, %v1201
    %v1512 = vpack.c.b16 %v1207, %v1202
    %v1513 = vpack.c.b16 %v1208, %v1203
    %v1514 = vpack.c.b16 %v1209, %v1204
    %v1515 = vpack.c.b16 %v1215, %v1210
    %v1516 = vpack.c.b16 %v1216, %v1211
    %v1517 = vpack.c.b16 %v1217, %v1212
    %v1518 = vpack.c.b16 %v1218, %v1213
    %v1519 = vpack.c.b16 %v1219, %v1214
    %v1520 = vpack.c.b16 %v1225, %v1220
    %v1521 = vpack.c.b16 %v1226, %v1221
    %v1522 = vpack.c.b16 %v1227, %v1222
    %v1523 = vpack.c.b16 %v1228, %v1223
    %v1524 = vpack.c.b16 %v1229, %v1224
    %v1525 = vpack.c.b16 %v1235, %v1230
    %v1526 = vpack.c.b16 %v1236, %v1231
    %v1527 = vpack.c.b16 %v1237, %v1232
    %v1528 = vpack.c.b16 %v1238, %v1233
    %v1529 = vpack.c.b16 %v1239, %v1234
    %v1530 = vpack.c.b16 %v1245, %v1240
    %v1531 = vpack.c.b16 %v1246, %v1241
    %v1532 = vpack.c.b16 %v1247, %v1242
    %v1533 = vpack.c.b16 %v1248, %v1243
    %v1534 = vpack.c.b16 %v1249, %v1244
    %v1535 = vpack.c.b16 %v1255, %v1250
    %v1536 = vpack.c.b16 %v1256, %v1251
    %v1537 = vpack.c.b16 %v1257, %v1252
    %v1538 = vpack.c.b16 %v1258, %v1253
    %v1539 = vpack.c.b16 %v1259, %v1254
    %v1540 = vpack.c.b16 %v1265, %v1260
    %v1541 = vpack.c.b16 %v1266, %v1261
    %v1542 = vpack.c.b16 %v1267, %v1262
    %v1543 = vpack.c.b16 %v1268, %v1263
    %v1544 = vpack.c.b16 %v1269, %v1264
    %v1545 = vpack.c.b16 %v1275, %v1270
    %v1546 = vpack.c.b16 %v1276, %v1271
    %v1547 = vpack.c.b16 %v1277, %v1272
    %v1548 = vpack.c.b16 %v1278, %v1273
    %v1549 = vpack.c.b16 %v1279, %v1274
    %v1550 = vpack.c.b16 %v1285, %v1280
    %v1551 = vpack.c.b16 %v1286, %v1281
    %v1552 = vpack.c.b16 %v1287, %v1282
    %v1553 = vpack.c.b16 %v1288, %v1283
    %v1554 = vpack.c.b16 %v1289, %v1284
    %v1555 = vpack.c.b16 %v1295, %v1290
    %v1556 = vpack.c.b16 %v1296, %v1291
    %v1557 = vpack.c.b16 %v1297, %v1292
    %v1558 = vpack.c.b16 %v1298, %v1293
    %v1559 = vpack.c.b16 %v1299, %v1294
    %v1560 = vpack.c.b16 %v1305, %v1300
    %v1561 = vpack.c.b16 %v1306, %v1301
    %v1562 = vpack.c.b16 %v1307, %v1302
    %v1563 = vpack.c.b16 %v1308, %v1303
    %v1564 = vpack.c.b16 %v1309, %v1304
    %v1565 = vpack.c.b16 %v1315, %v1310
    %v1566 = vpack.c.b16 %v1316, %v1311
    %v1567 = vpack.c.b16 %v1317, %v1312
    %v1568 = vpack.c.b16 %v1318, %v1313
    %v1569 = vpack.c.b16 %v1319, %v1314
    %v1570 = vpack.c.b16 %v1325, %v1320
    %v1571 = vpack.c.b16 %v1326, %v1321
    %v1572 = vpack.c.b16 %v1327, %v1322
    %v1573 = vpack.c.b16 %v1328, %v1323
    %v1574 = vpack.c.b16 %v1329, %v1324
    %v1575 = vpack.c.b16 %v1335, %v1330
    %v1576 = vpack.c.b16 %v1336, %v1331
    %v1577 = vpack.c.b16 %v1337, %v1332
    %v1578 = vpack.c.b16 %v1338, %v1333
    %v1579 = vpack.c.b16 %v1339, %v1334
    %v1580 = vpack.c.b16 %v1345, %v1340
    %v1581 = vpack.c.b16 %v1346, %v1341
    %v1582 = vpack.c.b16 %v1347, %v1342
    %v1583 = vpack.c.b16 %v1348, %v1343
    %v1584 = vpack.c.b16 %v1349, %v1344
    %v1585 = vpack.c.b16 %v1355, %v1350
    %v1586 = vpack.c.b16 %v1356, %v1351
    %v1587 = vpack.c.b16 %v1357, %v1352
    %v1588 = vpack.c.b16 %v1358, %v1353
    %v1589 = vpack.c.b16 %v1359, %v1354
    %v1590 = vpack.c.b16 %v1365, %v1360
    %v1591 = vpack.c.b16 %v1366, %v1361
    %v1592 = vpack.c.b16 %v1367, %v1362
    %v1593 = vpack.c.b16 %v1368, %v1363
    %v1594 = vpack.c.b16 %v1369, %v1364
    %v1595 = vpack.c.b16 %v1375, %v1370
    %v1596 = vpack.c.b16 %v1376, %v1371
    %v1597 = vpack.c.b16 %v1377, %v1372
    %v1598 = vpack.c.b16 %v1378, %v1373
    %v1599 = vpack.c.b16 %v1379, %v1374
    %v1600 = vpack.c.b16 %v1385, %v1380
    %v1601 = vpack.c.b16 %v1386, %v1381
    %v1602 = vpack.c.b16 %v1387, %v1382
    %v1603 = vpack.c.b16 %v1388, %v1383
    %v1604 = vpack.c.b16 %v1389, %v1384
    %v1605 = vpack.c.b16 %v1395, %v1390
    %v1606 = vpack.c.b16 %v1396, %v1391
    %v1607 = vpack.c.b16 %v1397, %v1392
    %v1608 = vpack.c.b16 %v1398, %v1393
    %v1609 = vpack.c.b16 %v1399, %v1394
    %v1610 = vpack.c.b16 %v1405, %v1400
    %v1611 = vpack.c.b16 %v1406, %v1401
    %v1612 = vpack.c.b16 %v1407, %v1402
    %v1613 = vpack.c.b16 %v1408, %v1403
    %v1614 = vpack.c.b16 %v1409, %v1404
    %v1615 = vpack.c.b16 %v1415, %v1410
    %v1616 = vpack.c.b16 %v1416, %v1411
    %v1617 = vpack.c.b16 %v1417, %v1412
    %v1618 = vpack.c.b16 %v1418, %v1413
    %v1619 = vpack.c.b16 %v1419, %v1414
    %1820 = vmatprep.subr.bf16.mxu0 %v1421
    %1821 = vmatpush1.bf16.msra.mxu0 %v1420
    %1822 = vmatprep.subr.bf16.mxu0 %v1426
    %1823 = vmatpush1.bf16.msra.mxu0 %v1425
    %1824 = vmatprep.subr.bf16.mxu0 %v1431
    %1825 = vmatpush1.bf16.msra.mxu0 %v1430
    %1826 = vmatprep.subr.bf16.mxu0 %v1436
    %1827 = vmatpush1.bf16.msra.mxu0 %v1435
    %1828 = vmatprep.subr.bf16.mxu0 %v1441
    %1829 = vmatpush1.bf16.msra.mxu0 %v1440
    %1830 = vmatprep.subr.bf16.mxu0 %v1446
    %1831 = vmatpush1.bf16.msra.mxu0 %v1445
    %1832 = vmatprep.subr.bf16.mxu0 %v1451
    %1833 = vmatpush1.bf16.msra.mxu0 %v1450
    %1834 = vmatprep.subr.bf16.mxu0 %v1456
    %1835 = vmatpush1.bf16.msra.mxu0 %v1455
    %1836 = vmatprep.subr.bf16.mxu0 %v1461
    %1837 = vmatpush1.bf16.msra.mxu0 %v1460
    %1838 = vmatprep.subr.bf16.mxu0 %v1466
    %1839 = vmatpush1.bf16.msra.mxu0 %v1465
    %1840 = vmatprep.subr.bf16.mxu0 %v1471
    %1841 = vmatpush1.bf16.msra.mxu0 %v1470
    %1842 = vmatprep.subr.bf16.mxu0 %v1476
    %1843 = vmatpush1.bf16.msra.mxu0 %v1475
    %1844 = vmatprep.subr.bf16.mxu0 %v1481
    %1845 = vmatpush1.bf16.msra.mxu0 %v1480
    %1846 = vmatprep.subr.bf16.mxu0 %v1486
    %1847 = vmatpush1.bf16.msra.mxu0 %v1485
    %1848 = vmatprep.subr.bf16.mxu0 %v1491
    %1849 = vmatpush1.bf16.msra.mxu0 %v1490
    %1850 = vmatprep.subr.bf16.mxu0 %v1496
    %1851 = vmatpush1.bf16.msra.mxu0 %v1495
    %1852 = vmatprep.mubr.bf16.mxu0 %v509
    %1853 = vmatmul.mubr.bf16.gmra.mrb[0].mxu0 %v508
    %v1854 = vpop.f32.mrb[0].mxu0
    %v1855 = vadd.f32 %v758, %v1854
    %v1856 = vpop.f32.mrb[0].mxu0
    %v1857 = vadd.f32 %v762, %v1856
    %v1858 = vpop.f32.mrb[0].mxu0
    %v1859 = vpop.f32.mrb[0].mxu0
    %1860 = vdwg.mxu0
    %1861 = vmatprep.subr.bf16.mxu0 %v1501
    %1862 = vmatpush1.bf16.msra.mxu0 %v1500
    %1863 = vmatprep.subr.bf16.mxu0 %v1506
    %1864 = vmatpush1.bf16.msra.mxu0 %v1505
    %1865 = vmatprep.subr.bf16.mxu0 %v1511
    %1866 = vmatpush1.bf16.msra.mxu0 %v1510
    %1867 = vmatprep.subr.bf16.mxu0 %v1516
    %1868 = vmatpush1.bf16.msra.mxu0 %v1515
    %1869 = vmatprep.subr.bf16.mxu0 %v1521
    %1870 = vmatpush1.bf16.msra.mxu0 %v1520
    %1871 = vmatprep.subr.bf16.mxu0 %v1526
    %1872 = vmatpush1.bf16.msra.mxu0 %v1525
    %1873 = vmatprep.subr.bf16.mxu0 %v1531
    %1874 = vmatpush1.bf16.msra.mxu0 %v1530
    %1875 = vmatprep.subr.bf16.mxu0 %v1536
    %1876 = vmatpush1.bf16.msra.mxu0 %v1535
    %1877 = vmatprep.subr.bf16.mxu0 %v1541
    %1878 = vmatpush1.bf16.msra.mxu0 %v1540
    %1879 = vmatprep.subr.bf16.mxu0 %v1546
    %1880 = vmatpush1.bf16.msra.mxu0 %v1545
    %1881 = vmatprep.subr.bf16.mxu0 %v1551
    %1882 = vmatpush1.bf16.msra.mxu0 %v1550
    %1883 = vmatprep.subr.bf16.mxu0 %v1556
    %1884 = vmatpush1.bf16.msra.mxu0 %v1555
    %1885 = vmatprep.subr.bf16.mxu0 %v1561
    %1886 = vmatpush1.bf16.msra.mxu0 %v1560
    %1887 = vmatprep.subr.bf16.mxu0 %v1566
    %1888 = vmatpush1.bf16.msra.mxu0 %v1565
    %1889 = vmatprep.subr.bf16.mxu0 %v1571
    %1890 = vmatpush1.bf16.msra.mxu0 %v1570
    %1891 = vmatprep.subr.bf16.mxu0 %v1576
    %1892 = vmatpush1.bf16.msra.mxu0 %v1575
    %1893 = vmatprep.mubr.bf16.mxu0 %v511
    %1894 = vmatmul.mubr.bf16.gmra.mrb[0].mxu0 %v510
    %v1895 = vpop.f32.mrb[0].mxu0
    %v1896 = vadd.f32 %v1855, %v1895
    %v1897 = vpop.f32.mrb[0].mxu0
    %v1898 = vadd.f32 %v1857, %v1897
    %v1899 = vpop.f32.mrb[0].mxu0
    %v1900 = vpop.f32.mrb[0].mxu0
    %1901 = vdwg.mxu0
    %1902 = vmatprep.subr.bf16.mxu0 %v1581
    %1903 = vmatpush1.bf16.msra.mxu0 %v1580
    %1904 = vmatprep.subr.bf16.mxu0 %v1586
    %1905 = vmatpush1.bf16.msra.mxu0 %v1585
    %1906 = vmatprep.subr.bf16.mxu0 %v1591
    %1907 = vmatpush1.bf16.msra.mxu0 %v1590
    %1908 = vmatprep.subr.bf16.mxu0 %v1596
    %1909 = vmatpush1.bf16.msra.mxu0 %v1595
    %1910 = vmatprep.subr.bf16.mxu0 %v1601
    %1911 = vmatpush1.bf16.msra.mxu0 %v1600
    %1912 = vmatprep.subr.bf16.mxu0 %v1606
    %1913 = vmatpush1.bf16.msra.mxu0 %v1605
    %1914 = vmatprep.subr.bf16.mxu0 %v1611
    %1915 = vmatpush1.bf16.msra.mxu0 %v1610
    %1916 = vmatprep.subr.bf16.mxu0 %v1616
    %1917 = vmatpush1.bf16.msra.mxu0 %v1615
    %1918 = vmatprep.subr.bf16.mxu0 0
    %1919 = vmatpush1.bf16.msra.mxu0 0
    %1920 = vmatprep.subr.bf16.mxu0 0
    %1921 = vmatpush1.bf16.msra.mxu0 0
    %1922 = vmatprep.subr.bf16.mxu0 0
    %1923 = vmatpush1.bf16.msra.mxu0 0
    %1924 = vmatprep.subr.bf16.mxu0 0
    %1925 = vmatpush1.bf16.msra.mxu0 0
    %1926 = vmatprep.subr.bf16.mxu0 0
    %1927 = vmatpush1.bf16.msra.mxu0 0
    %1928 = vmatprep.subr.bf16.mxu0 0
    %1929 = vmatpush1.bf16.msra.mxu0 0
    %1930 = vmatprep.subr.bf16.mxu0 0
    %1931 = vmatpush1.bf16.msra.mxu0 0
    %1932 = vmatprep.subr.bf16.mxu0 0
    %1933 = vmatpush1.bf16.msra.mxu0 0
    %1934 = vmatprep.mubr.bf16.mxu0 0
    %1935 = vmatmul.mubr.bf16.gmra.mrb[0].mxu0 %v512
    %v1936 = vpop.f32.mrb[0].mxu0
    %v1937 = vadd.f32 %v1896, %v1936
    %v1938 = vpop.f32.mrb[0].mxu0
    %v1939 = vadd.f32 %v1898, %v1938
    %v1940 = vpop.f32.mrb[0].mxu0
    %v1941 = vpop.f32.mrb[0].mxu0
    %1942 = vdwg.mxu0
    %1943 = vmatprep.subr.bf16.mxu0 %v1423
    %1944 = vmatpush1.bf16.msra.mxu0 %v1422
    %1945 = vmatprep.subr.bf16.mxu0 %v1428
    %1946 = vmatpush1.bf16.msra.mxu0 %v1427
    %1947 = vmatprep.subr.bf16.mxu0 %v1433
    %1948 = vmatpush1.bf16.msra.mxu0 %v1432
    %1949 = vmatprep.subr.bf16.mxu0 %v1438
    %1950 = vmatpush1.bf16.msra.mxu0 %v1437
    %1951 = vmatprep.subr.bf16.mxu0 %v1443
    %1952 = vmatpush1.bf16.msra.mxu0 %v1442
    %1953 = vmatprep.subr.bf16.mxu0 %v1448
    %1954 = vmatpush1.bf16.msra.mxu0 %v1447
    %1955 = vmatprep.subr.bf16.mxu0 %v1453
    %1956 = vmatpush1.bf16.msra.mxu0 %v1452
    %1957 = vmatprep.subr.bf16.mxu0 %v1458
    %1958 = vmatpush1.bf16.msra.mxu0 %v1457
    %1959 = vmatprep.subr.bf16.mxu0 %v1463
    %1960 = vmatpush1.bf16.msra.mxu0 %v1462
    %1961 = vmatprep.subr.bf16.mxu0 %v1468
    %1962 = vmatpush1.bf16.msra.mxu0 %v1467
    %1963 = vmatprep.subr.bf16.mxu0 %v1473
    %1964 = vmatpush1.bf16.msra.mxu0 %v1472
    %1965 = vmatprep.subr.bf16.mxu0 %v1478
    %1966 = vmatpush1.bf16.msra.mxu0 %v1477
    %1967 = vmatprep.subr.bf16.mxu0 %v1483
    %1968 = vmatpush1.bf16.msra.mxu0 %v1482
    %1969 = vmatprep.subr.bf16.mxu0 %v1488
    %1970 = vmatpush1.bf16.msra.mxu0 %v1487
    %1971 = vmatprep.subr.bf16.mxu0 %v1493
    %1972 = vmatpush1.bf16.msra.mxu0 %v1492
    %1973 = vmatprep.subr.bf16.mxu0 %v1498
    %1974 = vmatpush1.bf16.msra.mxu0 %v1497
    %1975 = vmatprep.mubr.bf16.mxu0 %v509
    %1976 = vmatmul.mubr.bf16.gmra.mrb[0].mxu0 %v508
    %v1977 = vpop.f32.mrb[0].mxu0
    %v1978 = vadd.f32 %v766, %v1977
    %v1979 = vpop.f32.mrb[0].mxu0
    %v1980 = vadd.f32 %v770, %v1979
    %v1981 = vpop.f32.mrb[0].mxu0
    %v1982 = vpop.f32.mrb[0].mxu0
    %1983 = vdwg.mxu0
    %1984 = vmatprep.subr.bf16.mxu0 %v1503
    %1985 = vmatpush1.bf16.msra.mxu0 %v1502
    %1986 = vmatprep.subr.bf16.mxu0 %v1508
    %1987 = vmatpush1.bf16.msra.mxu0 %v1507
    %1988 = vmatprep.subr.bf16.mxu0 %v1513
    %1989 = vmatpush1.bf16.msra.mxu0 %v1512
    %1990 = vmatprep.subr.bf16.mxu0 %v1518
    %1991 = vmatpush1.bf16.msra.mxu0 %v1517
    %1992 = vmatprep.subr.bf16.mxu0 %v1523
    %1993 = vmatpush1.bf16.msra.mxu0 %v1522
    %1994 = vmatprep.subr.bf16.mxu0 %v1528
    %1995 = vmatpush1.bf16.msra.mxu0 %v1527
    %1996 = vmatprep.subr.bf16.mxu0 %v1533
    %1997 = vmatpush1.bf16.msra.mxu0 %v1532
    %1998 = vmatprep.subr.bf16.mxu0 %v1538
    %1999 = vmatpush1.bf16.msra.mxu0 %v1537
    %2000 = vmatprep.subr.bf16.mxu0 %v1543
    %2001 = vmatpush1.bf16.msra.mxu0 %v1542
    %2002 = vmatprep.subr.bf16.mxu0 %v1548
    %2003 = vmatpush1.bf16.msra.mxu0 %v1547
    %2004 = vmatprep.subr.bf16.mxu0 %v1553
    %2005 = vmatpush1.bf16.msra.mxu0 %v1552
    %2006 = vmatprep.subr.bf16.mxu0 %v1558
    %2007 = vmatpush1.bf16.msra.mxu0 %v1557
    %2008 = vmatprep.subr.bf16.mxu0 %v1563
    %2009 = vmatpush1.bf16.msra.mxu0 %v1562
    %2010 = vmatprep.subr.bf16.mxu0 %v1568
    %2011 = vmatpush1.bf16.msra.mxu0 %v1567
    %2012 = vmatprep.subr.bf16.mxu0 %v1573
    %2013 = vmatpush1.bf16.msra.mxu0 %v1572
    %2014 = vmatprep.subr.bf16.mxu0 %v1578
    %2015 = vmatpush1.bf16.msra.mxu0 %v1577
    %2016 = vmatprep.mubr.bf16.mxu0 %v511
    %2017 = vmatmul.mubr.bf16.gmra.mrb[0].mxu0 %v510
    %v2018 = vpop.f32.mrb[0].mxu0
    %v2019 = vadd.f32 %v1978, %v2018
    %v2020 = vpop.f32.mrb[0].mxu0
    %v2021 = vadd.f32 %v1980, %v2020
    %v2022 = vpop.f32.mrb[0].mxu0
    %v2023 = vpop.f32.mrb[0].mxu0
    %2024 = vdwg.mxu0
    %2025 = vmatprep.subr.bf16.mxu0 %v1583
    %2026 = vmatpush1.bf16.msra.mxu0 %v1582
    %2027 = vmatprep.subr.bf16.mxu0 %v1588
    %2028 = vmatpush1.bf16.msra.mxu0 %v1587
    %2029 = vmatprep.subr.bf16.mxu0 %v1593
    %2030 = vmatpush1.bf16.msra.mxu0 %v1592
    %2031 = vmatprep.subr.bf16.mxu0 %v1598
    %2032 = vmatpush1.bf16.msra.mxu0 %v1597
    %2033 = vmatprep.subr.bf16.mxu0 %v1603
    %2034 = vmatpush1.bf16.msra.mxu0 %v1602
    %2035 = vmatprep.subr.bf16.mxu0 %v1608
    %2036 = vmatpush1.bf16.msra.mxu0 %v1607
    %2037 = vmatprep.subr.bf16.mxu0 %v1613
    %2038 = vmatpush1.bf16.msra.mxu0 %v1612
    %2039 = vmatprep.subr.bf16.mxu0 %v1618
    %2040 = vmatpush1.bf16.msra.mxu0 %v1617
    %2041 = vmatprep.subr.bf16.mxu0 0
    %2042 = vmatpush1.bf16.msra.mxu0 0
    %2043 = vmatprep.subr.bf16.mxu0 0
    %2044 = vmatpush1.bf16.msra.mxu0 0
    %2045 = vmatprep.subr.bf16.mxu0 0
    %2046 = vmatpush1.bf16.msra.mxu0 0
    %2047 = vmatprep.subr.bf16.mxu0 0
    %2048 = vmatpush1.bf16.msra.mxu0 0
    %2049 = vmatprep.subr.bf16.mxu0 0
    %2050 = vmatpush1.bf16.msra.mxu0 0
    %2051 = vmatprep.subr.bf16.mxu0 0
    %2052 = vmatpush1.bf16.msra.mxu0 0
    %2053 = vmatprep.subr.bf16.mxu0 0
    %2054 = vmatpush1.bf16.msra.mxu0 0
    %2055 = vmatprep.subr.bf16.mxu0 0
    %2056 = vmatpush1.bf16.msra.mxu0 0
    %2057 = vmatprep.mubr.bf16.mxu0 0
    %2058 = vmatmul.mubr.bf16.gmra.mrb[0].mxu0 %v512
    %v2059 = vpop.f32.mrb[0].mxu0
    %v2060 = vadd.f32 %v2019, %v2059
    %v2061 = vpop.f32.mrb[0].mxu0
    %v2062 = vadd.f32 %v2021, %v2061
    %v2063 = vpop.f32.mrb[0].mxu0
    %v2064 = vpop.f32.mrb[0].mxu0
    %2065 = vdwg.mxu0
    %2066 = vmatprep.subr.bf16.mxu0 0
    %2067 = vmatpush1.bf16.msra.mxu0 %v1424
    %2068 = vmatprep.subr.bf16.mxu0 0
    %2069 = vmatpush1.bf16.msra.mxu0 %v1429
    %2070 = vmatprep.subr.bf16.mxu0 0
    %2071 = vmatpush1.bf16.msra.mxu0 %v1434
    %2072 = vmatprep.subr.bf16.mxu0 0
    %2073 = vmatpush1.bf16.msra.mxu0 %v1439
    %2074 = vmatprep.subr.bf16.mxu0 0
    %2075 = vmatpush1.bf16.msra.mxu0 %v1444
    %2076 = vmatprep.subr.bf16.mxu0 0
    %2077 = vmatpush1.bf16.msra.mxu0 %v1449
    %2078 = vmatprep.subr.bf16.mxu0 0
    %2079 = vmatpush1.bf16.msra.mxu0 %v1454
    %2080 = vmatprep.subr.bf16.mxu0 0
    %2081 = vmatpush1.bf16.msra.mxu0 %v1459
    %2082 = vmatprep.subr.bf16.mxu0 0
    %2083 = vmatpush1.bf16.msra.mxu0 %v1464
    %2084 = vmatprep.subr.bf16.mxu0 0
    %2085 = vmatpush1.bf16.msra.mxu0 %v1469
    %2086 = vmatprep.subr.bf16.mxu0 0
    %2087 = vmatpush1.bf16.msra.mxu0 %v1474
    %2088 = vmatprep.subr.bf16.mxu0 0
    %2089 = vmatpush1.bf16.msra.mxu0 %v1479
    %2090 = vmatprep.subr.bf16.mxu0 0
    %2091 = vmatpush1.bf16.msra.mxu0 %v1484
    %2092 = vmatprep.subr.bf16.mxu0 0
    %2093 = vmatpush1.bf16.msra.mxu0 %v1489
    %2094 = vmatprep.subr.bf16.mxu0 0
    %2095 = vmatpush1.bf16.msra.mxu0 %v1494
    %2096 = vmatprep.subr.bf16.mxu0 0
    %2097 = vmatpush1.bf16.msra.mxu0 %v1499
    %2098 = vmatprep.mubr.bf16.mxu0 %v509
    %2099 = vmatmul.mubr.bf16.gmra.mrb[0].mxu0 %v508
    %v2100 = vpop.f32.mrb[0].mxu0
    %v2101 = vadd.f32 %v774, %v2100
    %v2102 = vpop.f32.mrb[0].mxu0
    %v2103 = vpop.f32.mrb[0].mxu0
    %v2104 = vpop.f32.mrb[0].mxu0
    %2105 = vdwg.mxu0
    %2106 = vmatprep.subr.bf16.mxu0 0
    %2107 = vmatpush1.bf16.msra.mxu0 %v1504
    %2108 = vmatprep.subr.bf16.mxu0 0
    %2109 = vmatpush1.bf16.msra.mxu0 %v1509
    %2110 = vmatprep.subr.bf16.mxu0 0
    %2111 = vmatpush1.bf16.msra.mxu0 %v1514
    %2112 = vmatprep.subr.bf16.mxu0 0
    %2113 = vmatpush1.bf16.msra.mxu0 %v1519
    %2114 = vmatprep.subr.bf16.mxu0 0
    %2115 = vmatpush1.bf16.msra.mxu0 %v1524
    %2116 = vmatprep.subr.bf16.mxu0 0
    %2117 = vmatpush1.bf16.msra.mxu0 %v1529
    %2118 = vmatprep.subr.bf16.mxu0 0
    %2119 = vmatpush1.bf16.msra.mxu0 %v1534
    %2120 = vmatprep.subr.bf16.mxu0 0
    %2121 = vmatpush1.bf16.msra.mxu0 %v1539
    %2122 = vmatprep.subr.bf16.mxu0 0
    %2123 = vmatpush1.bf16.msra.mxu0 %v1544
    %2124 = vmatprep.subr.bf16.mxu0 0
    %2125 = vmatpush1.bf16.msra.mxu0 %v1549
    %2126 = vmatprep.subr.bf16.mxu0 0
    %2127 = vmatpush1.bf16.msra.mxu0 %v1554
    %2128 = vmatprep.subr.bf16.mxu0 0
    %2129 = vmatpush1.bf16.msra.mxu0 %v1559
    %2130 = vmatprep.subr.bf16.mxu0 0
    %2131 = vmatpush1.bf16.msra.mxu0 %v1564
    %2132 = vmatprep.subr.bf16.mxu0 0
    %2133 = vmatpush1.bf16.msra.mxu0 %v1569
    %2134 = vmatprep.subr.bf16.mxu0 0
    %2135 = vmatpush1.bf16.msra.mxu0 %v1574
    %2136 = vmatprep.subr.bf16.mxu0 0
    %2137 = vmatpush1.bf16.msra.mxu0 %v1579
    %2138 = vmatprep.mubr.bf16.mxu0 %v511
    %2139 = vmatmul.mubr.bf16.gmra.mrb[0].mxu0 %v510
    %v2140 = vpop.f32.mrb[0].mxu0
    %v2141 = vadd.f32 %v2101, %v2140
    %v2142 = vpop.f32.mrb[0].mxu0
    %v2143 = vpop.f32.mrb[0].mxu0
    %v2144 = vpop.f32.mrb[0].mxu0
    %2145 = vdwg.mxu0
    %2146 = vmatprep.subr.bf16.mxu0 0
    %2147 = vmatpush1.bf16.msra.mxu0 %v1584
    %2148 = vmatprep.subr.bf16.mxu0 0
    %2149 = vmatpush1.bf16.msra.mxu0 %v1589
    %2150 = vmatprep.subr.bf16.mxu0 0
    %2151 = vmatpush1.bf16.msra.mxu0 %v1594
    %2152 = vmatprep.subr.bf16.mxu0 0
    %2153 = vmatpush1.bf16.msra.mxu0 %v1599
    %2154 = vmatprep.subr.bf16.mxu0 0
    %2155 = vmatpush1.bf16.msra.mxu0 %v1604
    %2156 = vmatprep.subr.bf16.mxu0 0
    %2157 = vmatpush1.bf16.msra.mxu0 %v1609
    %2158 = vmatprep.subr.bf16.mxu0 0
    %2159 = vmatpush1.bf16.msra.mxu0 %v1614
    %2160 = vmatprep.subr.bf16.mxu0 0
    %2161 = vmatpush1.bf16.msra.mxu0 %v1619
    %2162 = vmatprep.subr.bf16.mxu0 0
    %2163 = vmatpush1.bf16.msra.mxu0 0
    %2164 = vmatprep.subr.bf16.mxu0 0
    %2165 = vmatpush1.bf16.msra.mxu0 0
    %2166 = vmatprep.subr.bf16.mxu0 0
    %2167 = vmatpush1.bf16.msra.mxu0 0
    %2168 = vmatprep.subr.bf16.mxu0 0
    %2169 = vmatpush1.bf16.msra.mxu0 0
    %2170 = vmatprep.subr.bf16.mxu0 0
    %2171 = vmatpush1.bf16.msra.mxu0 0
    %2172 = vmatprep.subr.bf16.mxu0 0
    %2173 = vmatpush1.bf16.msra.mxu0 0
    %2174 = vmatprep.subr.bf16.mxu0 0
    %2175 = vmatpush1.bf16.msra.mxu0 0
    %2176 = vmatprep.subr.bf16.mxu0 0
    %2177 = vmatpush1.bf16.msra.mxu0 0
    %2178 = vmatprep.mubr.bf16.mxu0 0
    %2179 = vmatmul.mubr.bf16.gmra.mrb[0].mxu0 %v512
    %v2180 = vpop.f32.mrb[0].mxu0
    %v2181 = vadd.f32 %v2141, %v2180
    %v2182 = vpop.f32.mrb[0].mxu0
    %v2183 = vpop.f32.mrb[0].mxu0
    %v2184 = vpop.f32.mrb[0].mxu0
    %2185 = vdwg.mxu0
    %v2186 = vpack.c.bf16 %v1937, %v1937
    %v2187 = vpack.c.bf16 %v1939, %v1939
    %v2188 = vpack.c.bf16 %v2060, %v2060
    %v2189 = vpack.c.bf16 %v2062, %v2062
    %v2190 = vpack.c.bf16 %v2181, %v2181
    %v2191 = vtanh.bf16.pop %v2186
    %v2192 = vtanh.bf16.pop %v2187
    %v2193 = vtanh.bf16.pop %v2188
    %v2194 = vtanh.bf16.pop %v2189
    %v2195 = vtanh.bf16.pop %v2190
    %v2196 = vld [vmem:[#allocation8] sm:$0xf]
    %v2197 = vld [vmem:[#allocation8 + $0x4] sm:$0xf]
    %v2198 = vld [vmem:[#allocation8 + $0x8] sm:$0xf]
    %v2199 = vld [vmem:[#allocation8 + $0xc] sm:$0xf]
    %v2200 = vld [vmem:[#allocation8 + $0x10] sm:$0xf]
    %v2201 = vld [vmem:[#allocation8 + $0x14] sm:$0xf]
    %v2202 = vld [vmem:[#allocation8 + $0x18] sm:$0xf]
    %v2203 = vld [vmem:[#allocation8 + $0x1c] sm:$0xf]
    %v2204 = vld [vmem:[#allocation8 + $0x20] sm:$0xf]
    %v2205 = vld [vmem:[#allocation8 + $0x24] sm:$0xf]
    %v2206 = vld [vmem:[#allocation8 + $0x28] sm:$0xf]
    %v2207 = vld [vmem:[#allocation8 + $0x2c] sm:$0xf]
    %v2208 = vld [vmem:[#allocation8 + $0x30] sm:$0xf]
    %v2209 = vld [vmem:[#allocation8 + $0x34] sm:$0xf]
    %v2210 = vld [vmem:[#allocation8 + $0x38] sm:$0xf]
    %v2211 = vld [vmem:[#allocation8 + $0x3c] sm:$0xf]
    %v2212 = vld [vmem:[#allocation8 + $0x40] sm:$0xf]
    %v2213 = vld [vmem:[#allocation8 + $0x44] sm:$0xf]
    %v2214 = vld [vmem:[#allocation8 + $0x48] sm:$0xf]
    %v2215 = vld [vmem:[#allocation8 + $0x4c] sm:$0xf]
    %v2216 = vld [vmem:[#allocation8 + $0x50] sm:$0xf]
    %v2217 = vld [vmem:[#allocation8 + $0x54] sm:$0xf]
    %v2218 = vld [vmem:[#allocation8 + $0x58] sm:$0xf]
    %v2219 = vld [vmem:[#allocation8 + $0x5c] sm:$0xf]
    %v2220 = vld [vmem:[#allocation8 + $0x60] sm:$0xf]
    %v2221 = vld [vmem:[#allocation8 + $0x64] sm:$0xf]
    %v2222 = vld [vmem:[#allocation8 + $0x68] sm:$0xf]
    %v2223 = vld [vmem:[#allocation8 + $0x6c] sm:$0xf]
    %v2224 = vld [vmem:[#allocation8 + $0x70] sm:$0xf]
    %v2225 = vld [vmem:[#allocation8 + $0x74] sm:$0xf]
    %v2226 = vld [vmem:[#allocation8 + $0x78] sm:$0xf]
    %v2227 = vld [vmem:[#allocation8 + $0x7c] sm:$0xf]
    %v2228 = vld [vmem:[#allocation8 + $0x80] sm:$0xf]
    %v2229 = vld [vmem:[#allocation8 + $0x84] sm:$0xf]
    %v2230 = vld [vmem:[#allocation8 + $0x88] sm:$0xf]
    %v2231 = vld [vmem:[#allocation8 + $0x8c] sm:$0xf]
    %v2232 = vld [vmem:[#allocation8 + $0x90] sm:$0xf]
    %v2233 = vld [vmem:[#allocation8 + $0x94] sm:$0xf]
    %v2234 = vld [vmem:[#allocation8 + $0x98] sm:$0xf]
    %v2235 = vld [vmem:[#allocation8 + $0x9c] sm:$0xf]
    %v2236 = vld [vmem:[#allocation8 + $0xa0] sm:$0xf]
    %v2237 = vld [vmem:[#allocation8 + $0xa4] sm:$0xf]
    %v2238 = vld [vmem:[#allocation8 + $0xa8] sm:$0xf]
    %v2239 = vld [vmem:[#allocation8 + $0xac] sm:$0xf]
    %v2240 = vld [vmem:[#allocation8 + $0xb0] sm:$0xf]
    %v2241 = vld [vmem:[#allocation8 + $0xb4] sm:$0xf]
    %v2242 = vld [vmem:[#allocation8 + $0xb8] sm:$0xf]
    %v2243 = vld [vmem:[#allocation8 + $0xbc] sm:$0xf]
    %v2244 = vld [vmem:[#allocation8 + $0xc0] sm:$0xf]
    %v2245 = vld [vmem:[#allocation8 + $0xc4] sm:$0xf]
    %v2246 = vld [vmem:[#allocation8 + $0xc8] sm:$0xf]
    %v2247 = vld [vmem:[#allocation8 + $0xcc] sm:$0xf]
    %v2248 = vld [vmem:[#allocation8 + $0xd0] sm:$0xf]
    %v2249 = vld [vmem:[#allocation8 + $0xd4] sm:$0xf]
    %v2250 = vld [vmem:[#allocation8 + $0xd8] sm:$0xf]
    %v2251 = vld [vmem:[#allocation8 + $0xdc] sm:$0xf]
    %v2252 = vld [vmem:[#allocation8 + $0xe0] sm:$0xf]
    %v2253 = vld [vmem:[#allocation8 + $0xe4] sm:$0xf]
    %v2254 = vld [vmem:[#allocation8 + $0xe8] sm:$0xf]
    %v2255 = vld [vmem:[#allocation8 + $0xec] sm:$0xf]
    %v2256 = vld [vmem:[#allocation8 + $0xf0] sm:$0xf]
    %v2257 = vld [vmem:[#allocation8 + $0xf4] sm:$0xf]
    %v2258 = vld [vmem:[#allocation8 + $0xf8] sm:$0xf]
    %v2259 = vld [vmem:[#allocation8 + $0xfc] sm:$0xf]
    %v2260 = vld [vmem:[#allocation8 + $0x100] sm:$0xf]
    %v2261 = vld [vmem:[#allocation8 + $0x104] sm:$0xf]
    %v2262 = vld [vmem:[#allocation8 + $0x108] sm:$0xf]
    %v2263 = vld [vmem:[#allocation8 + $0x10c] sm:$0xf]
    %v2264 = vld [vmem:[#allocation8 + $0x110] sm:$0xf]
    %v2265 = vld [vmem:[#allocation8 + $0x114] sm:$0xf]
    %v2266 = vld [vmem:[#allocation8 + $0x118] sm:$0xf]
    %v2267 = vld [vmem:[#allocation8 + $0x11c] sm:$0xf]
    %v2268 = vld [vmem:[#allocation8 + $0x120] sm:$0xf]
    %v2269 = vld [vmem:[#allocation8 + $0x124] sm:$0xf]
    %v2270 = vld [vmem:[#allocation8 + $0x128] sm:$0xf]
    %v2271 = vld [vmem:[#allocation8 + $0x12c] sm:$0xf]
    %v2272 = vld [vmem:[#allocation8 + $0x130] sm:$0xf]
    %v2273 = vld [vmem:[#allocation8 + $0x134] sm:$0xf]
    %v2274 = vld [vmem:[#allocation8 + $0x138] sm:$0xf]
    %v2275 = vld [vmem:[#allocation8 + $0x13c] sm:$0xf]
    %v2276 = vld [vmem:[#allocation10] sm:$0xf]
    %v2277 = vld [vmem:[#allocation10 + $0x4] sm:$0xf]
    %v2278 = vld [vmem:[#allocation10 + $0x8] sm:$0xf]
    %v2279 = vld [vmem:[#allocation10 + $0xc] sm:$0xf]
    %v2280 = vld [vmem:[#allocation10 + $0x10] sm:$0xf]
    %v2281 = vld [vmem:[#allocation10 + $0x14] sm:$0xf]
    %v2282 = vld [vmem:[#allocation10 + $0x18] sm:$0xf]
    %v2283 = vld [vmem:[#allocation10 + $0x1c] sm:$0xf]
    %v2284 = vld [vmem:[#allocation10 + $0x20] sm:$0xf]
    %v2285 = vld [vmem:[#allocation10 + $0x24] sm:$0xf]
    %v2286 = vld [vmem:[#allocation10 + $0x28] sm:$0xf]
    %v2287 = vld [vmem:[#allocation10 + $0x2c] sm:$0xf]
    %v2288 = vld [vmem:[#allocation10 + $0x30] sm:$0xf]
    %v2289 = vld [vmem:[#allocation10 + $0x34] sm:$0xf]
    %v2290 = vld [vmem:[#allocation10 + $0x38] sm:$0xf]
    %v2291 = vld [vmem:[#allocation10 + $0x3c] sm:$0xf]
    %v2308 = vunpack.c.l.b16 %v2276
    %v2309 = vunpack.c.l.b16 %v2277
    %v2310 = vunpack.c.l.b16 %v2278
    %v2311 = vunpack.c.l.b16 %v2279
    %v2312 = vunpack.c.l.b16 %v2280
    %v2313 = vunpack.c.l.b16 %v2281
    %v2314 = vunpack.c.l.b16 %v2282
    %v2315 = vunpack.c.l.b16 %v2283
    %v2316 = vunpack.c.l.b16 %v2284
    %v2317 = vunpack.c.l.b16 %v2285
    %v2318 = vunpack.c.l.b16 %v2286
    %v2319 = vunpack.c.l.b16 %v2287
    %v2320 = vunpack.c.l.b16 %v2288
    %v2321 = vunpack.c.l.b16 %v2289
    %v2322 = vunpack.c.l.b16 %v2290
    %v2323 = vunpack.c.l.b16 %v2291
    %v2324 = vpack.c.b16 %v2309, %v2308
    %v2325 = vpack.c.b16 %v2311, %v2310
    %v2326 = vpack.c.b16 %v2313, %v2312
    %v2327 = vpack.c.b16 %v2315, %v2314
    %v2328 = vpack.c.b16 %v2317, %v2316
    %v2329 = vpack.c.b16 %v2319, %v2318
    %v2330 = vpack.c.b16 %v2321, %v2320
    %v2331 = vpack.c.b16 %v2323, %v2322
    %2340 = vmatprep.subr.bf16.mxu0 0
    %2341 = vmatpush1.bf16.msra.mxu0 %v2324
    %2342 = vmatprep.subr.bf16.mxu0 0
    %2343 = vmatpush1.bf16.msra.mxu0 %v2325
    %2344 = vmatprep.subr.bf16.mxu0 0
    %2345 = vmatpush1.bf16.msra.mxu0 %v2326
    %2346 = vmatprep.subr.bf16.mxu0 0
    %2347 = vmatpush1.bf16.msra.mxu0 %v2327
    %2348 = vmatprep.subr.bf16.mxu0 0
    %2349 = vmatpush1.bf16.msra.mxu0 %v2328
    %2350 = vmatprep.subr.bf16.mxu0 0
    %2351 = vmatpush1.bf16.msra.mxu0 %v2329
    %2352 = vmatprep.subr.bf16.mxu0 0
    %2353 = vmatpush1.bf16.msra.mxu0 %v2330
    %2354 = vmatprep.subr.bf16.mxu0 0
    %2355 = vmatpush1.bf16.msra.mxu0 %v2331
    %2356 = vmatprep.subr.bf16.mxu0 0
    %2357 = vmatpush1.bf16.msra.mxu0 0
    %2358 = vmatprep.subr.bf16.mxu0 0
    %2359 = vmatpush1.bf16.msra.mxu0 0
    %2360 = vmatprep.subr.bf16.mxu0 0
    %2361 = vmatpush1.bf16.msra.mxu0 0
    %2362 = vmatprep.subr.bf16.mxu0 0
    %2363 = vmatpush1.bf16.msra.mxu0 0
    %2364 = vmatprep.subr.bf16.mxu0 0
    %2365 = vmatpush1.bf16.msra.mxu0 0
    %2366 = vmatprep.subr.bf16.mxu0 0
    %2367 = vmatpush1.bf16.msra.mxu0 0
    %2368 = vmatprep.subr.bf16.mxu0 0
    %2369 = vmatpush1.bf16.msra.mxu0 0
    %2370 = vmatprep.subr.bf16.mxu0 0
    %2371 = vmatpush1.bf16.msra.mxu0 0
    %2372 = vmatprep.mubr.bf16.mxu0 0
    %2373 = vmatmul.mubr.bf16.gmra.mrb[0].mxu0 %v97
    %v2374 = vpop.f32.mrb[0].mxu0
    %v2375 = vadd.f32 0.0, %v2374
    %v2376 = vpop.f32.mrb[0].mxu0
    %v2377 = vpop.f32.mrb[0].mxu0
    %v2378 = vpop.f32.mrb[0].mxu0
    %2379 = vdwg.mxu0
    %v2460 = vunpack.c.l.b16 %v2196
    %v2461 = vunpack.c.l.b16 %v2197
    %v2462 = vunpack.c.l.b16 %v2198
    %v2463 = vunpack.c.l.b16 %v2199
    %v2464 = vunpack.c.l.b16 %v2200
    %v2465 = vunpack.c.l.b16 %v2201
    %v2466 = vunpack.c.l.b16 %v2202
    %v2467 = vunpack.c.l.b16 %v2203
    %v2468 = vunpack.c.l.b16 %v2204
    %v2469 = vunpack.c.l.b16 %v2205
    %v2470 = vunpack.c.l.b16 %v2206
    %v2471 = vunpack.c.l.b16 %v2207
    %v2472 = vunpack.c.l.b16 %v2208
    %v2473 = vunpack.c.l.b16 %v2209
    %v2474 = vunpack.c.l.b16 %v2210
    %v2475 = vunpack.c.l.b16 %v2211
    %v2476 = vunpack.c.l.b16 %v2212
    %v2477 = vunpack.c.l.b16 %v2213
    %v2478 = vunpack.c.l.b16 %v2214
    %v2479 = vunpack.c.l.b16 %v2215
    %v2480 = vunpack.c.l.b16 %v2216
    %v2481 = vunpack.c.l.b16 %v2217
    %v2482 = vunpack.c.l.b16 %v2218
    %v2483 = vunpack.c.l.b16 %v2219
    %v2484 = vunpack.c.l.b16 %v2220
    %v2485 = vunpack.c.l.b16 %v2221
    %v2486 = vunpack.c.l.b16 %v2222
    %v2487 = vunpack.c.l.b16 %v2223
    %v2488 = vunpack.c.l.b16 %v2224
    %v2489 = vunpack.c.l.b16 %v2225
    %v2490 = vunpack.c.l.b16 %v2226
    %v2491 = vunpack.c.l.b16 %v2227
    %v2492 = vunpack.c.l.b16 %v2228
    %v2493 = vunpack.c.l.b16 %v2229
    %v2494 = vunpack.c.l.b16 %v2230
    %v2495 = vunpack.c.l.b16 %v2231
    %v2496 = vunpack.c.l.b16 %v2232
    %v2497 = vunpack.c.l.b16 %v2233
    %v2498 = vunpack.c.l.b16 %v2234
    %v2499 = vunpack.c.l.b16 %v2235
    %v2500 = vunpack.c.l.b16 %v2236
    %v2501 = vunpack.c.l.b16 %v2237
    %v2502 = vunpack.c.l.b16 %v2238
    %v2503 = vunpack.c.l.b16 %v2239
    %v2504 = vunpack.c.l.b16 %v2240
    %v2505 = vunpack.c.l.b16 %v2241
    %v2506 = vunpack.c.l.b16 %v2242
    %v2507 = vunpack.c.l.b16 %v2243
    %v2508 = vunpack.c.l.b16 %v2244
    %v2509 = vunpack.c.l.b16 %v2245
    %v2510 = vunpack.c.l.b16 %v2246
    %v2511 = vunpack.c.l.b16 %v2247
    %v2512 = vunpack.c.l.b16 %v2248
    %v2513 = vunpack.c.l.b16 %v2249
    %v2514 = vunpack.c.l.b16 %v2250
    %v2515 = vunpack.c.l.b16 %v2251
    %v2516 = vunpack.c.l.b16 %v2252
    %v2517 = vunpack.c.l.b16 %v2253
    %v2518 = vunpack.c.l.b16 %v2254
    %v2519 = vunpack.c.l.b16 %v2255
    %v2520 = vunpack.c.l.b16 %v2256
    %v2521 = vunpack.c.l.b16 %v2257
    %v2522 = vunpack.c.l.b16 %v2258
    %v2523 = vunpack.c.l.b16 %v2259
    %v2524 = vunpack.c.l.b16 %v2260
    %v2525 = vunpack.c.l.b16 %v2261
    %v2526 = vunpack.c.l.b16 %v2262
    %v2527 = vunpack.c.l.b16 %v2263
    %v2528 = vunpack.c.l.b16 %v2264
    %v2529 = vunpack.c.l.b16 %v2265
    %v2530 = vunpack.c.l.b16 %v2266
    %v2531 = vunpack.c.l.b16 %v2267
    %v2532 = vunpack.c.l.b16 %v2268
    %v2533 = vunpack.c.l.b16 %v2269
    %v2534 = vunpack.c.l.b16 %v2270
    %v2535 = vunpack.c.l.b16 %v2271
    %v2536 = vunpack.c.l.b16 %v2272
    %v2537 = vunpack.c.l.b16 %v2273
    %v2538 = vunpack.c.l.b16 %v2274
    %v2539 = vunpack.c.l.b16 %v2275
    %v2540 = vpack.c.b16 %v2461, %v2460
    %v2541 = vpack.c.b16 %v2463, %v2462
    %v2542 = vpack.c.b16 %v2465, %v2464
    %v2543 = vpack.c.b16 %v2467, %v2466
    %v2544 = vpack.c.b16 %v2469, %v2468
    %v2545 = vpack.c.b16 %v2471, %v2470
    %v2546 = vpack.c.b16 %v2473, %v2472
    %v2547 = vpack.c.b16 %v2475, %v2474
    %v2548 = vpack.c.b16 %v2477, %v2476
    %v2549 = vpack.c.b16 %v2479, %v2478
    %v2550 = vpack.c.b16 %v2481, %v2480
    %v2551 = vpack.c.b16 %v2483, %v2482
    %v2552 = vpack.c.b16 %v2485, %v2484
    %v2553 = vpack.c.b16 %v2487, %v2486
    %v2554 = vpack.c.b16 %v2489, %v2488
    %v2555 = vpack.c.b16 %v2491, %v2490
    %v2556 = vpack.c.b16 %v2493, %v2492
    %v2557 = vpack.c.b16 %v2495, %v2494
    %v2558 = vpack.c.b16 %v2497, %v2496
    %v2559 = vpack.c.b16 %v2499, %v2498
    %v2560 = vpack.c.b16 %v2501, %v2500
    %v2561 = vpack.c.b16 %v2503, %v2502
    %v2562 = vpack.c.b16 %v2505, %v2504
    %v2563 = vpack.c.b16 %v2507, %v2506
    %v2564 = vpack.c.b16 %v2509, %v2508
    %v2565 = vpack.c.b16 %v2511, %v2510
    %v2566 = vpack.c.b16 %v2513, %v2512
    %v2567 = vpack.c.b16 %v2515, %v2514
    %v2568 = vpack.c.b16 %v2517, %v2516
    %v2569 = vpack.c.b16 %v2519, %v2518
    %v2570 = vpack.c.b16 %v2521, %v2520
    %v2571 = vpack.c.b16 %v2523, %v2522
    %v2572 = vpack.c.b16 %v2525, %v2524
    %v2573 = vpack.c.b16 %v2527, %v2526
    %v2574 = vpack.c.b16 %v2529, %v2528
    %v2575 = vpack.c.b16 %v2531, %v2530
    %v2576 = vpack.c.b16 %v2533, %v2532
    %v2577 = vpack.c.b16 %v2535, %v2534
    %v2578 = vpack.c.b16 %v2537, %v2536
    %v2579 = vpack.c.b16 %v2539, %v2538
    %2620 = vmatprep.subr.bf16.mxu0 0
    %2621 = vmatpush1.bf16.msra.mxu0 %v2540
    %2622 = vmatprep.subr.bf16.mxu0 0
    %2623 = vmatpush1.bf16.msra.mxu0 %v2541
    %2624 = vmatprep.subr.bf16.mxu0 0
    %2625 = vmatpush1.bf16.msra.mxu0 %v2542
    %2626 = vmatprep.subr.bf16.mxu0 0
    %2627 = vmatpush1.bf16.msra.mxu0 %v2543
    %2628 = vmatprep.subr.bf16.mxu0 0
    %2629 = vmatpush1.bf16.msra.mxu0 %v2544
    %2630 = vmatprep.subr.bf16.mxu0 0
    %2631 = vmatpush1.bf16.msra.mxu0 %v2545
    %2632 = vmatprep.subr.bf16.mxu0 0
    %2633 = vmatpush1.bf16.msra.mxu0 %v2546
    %2634 = vmatprep.subr.bf16.mxu0 0
    %2635 = vmatpush1.bf16.msra.mxu0 %v2547
    %2636 = vmatprep.subr.bf16.mxu0 0
    %2637 = vmatpush1.bf16.msra.mxu0 %v2548
    %2638 = vmatprep.subr.bf16.mxu0 0
    %2639 = vmatpush1.bf16.msra.mxu0 %v2549
    %2640 = vmatprep.subr.bf16.mxu0 0
    %2641 = vmatpush1.bf16.msra.mxu0 %v2550
    %2642 = vmatprep.subr.bf16.mxu0 0
    %2643 = vmatpush1.bf16.msra.mxu0 %v2551
    %2644 = vmatprep.subr.bf16.mxu0 0
    %2645 = vmatpush1.bf16.msra.mxu0 %v2552
    %2646 = vmatprep.subr.bf16.mxu0 0
    %2647 = vmatpush1.bf16.msra.mxu0 %v2553
    %2648 = vmatprep.subr.bf16.mxu0 0
    %2649 = vmatpush1.bf16.msra.mxu0 %v2554
    %2650 = vmatprep.subr.bf16.mxu0 0
    %2651 = vmatpush1.bf16.msra.mxu0 %v2555
    %2652 = vmatprep.mubr.bf16.mxu0 %v2192
    %2653 = vmatmul.mubr.bf16.gmra.mrb[0].mxu0 %v2191
    %v2654 = vpop.f32.mrb[0].mxu0
    %v2655 = vadd.f32 %v2375, %v2654
    %v2656 = vpop.f32.mrb[0].mxu0
    %v2657 = vpop.f32.mrb[0].mxu0
    %v2658 = vpop.f32.mrb[0].mxu0
    %2659 = vdwg.mxu0
    %2660 = vmatprep.subr.bf16.mxu0 0
    %2661 = vmatpush1.bf16.msra.mxu0 %v2556
    %2662 = vmatprep.subr.bf16.mxu0 0
    %2663 = vmatpush1.bf16.msra.mxu0 %v2557
    %2664 = vmatprep.subr.bf16.mxu0 0
    %2665 = vmatpush1.bf16.msra.mxu0 %v2558
    %2666 = vmatprep.subr.bf16.mxu0 0
    %2667 = vmatpush1.bf16.msra.mxu0 %v2559
    %2668 = vmatprep.subr.bf16.mxu0 0
    %2669 = vmatpush1.bf16.msra.mxu0 %v2560
    %2670 = vmatprep.subr.bf16.mxu0 0
    %2671 = vmatpush1.bf16.msra.mxu0 %v2561
    %2672 = vmatprep.subr.bf16.mxu0 0
    %2673 = vmatpush1.bf16.msra.mxu0 %v2562
    %2674 = vmatprep.subr.bf16.mxu0 0
    %2675 = vmatpush1.bf16.msra.mxu0 %v2563
    %2676 = vmatprep.subr.bf16.mxu0 0
    %2677 = vmatpush1.bf16.msra.mxu0 %v2564
    %2678 = vmatprep.subr.bf16.mxu0 0
    %2679 = vmatpush1.bf16.msra.mxu0 %v2565
    %2680 = vmatprep.subr.bf16.mxu0 0
    %2681 = vmatpush1.bf16.msra.mxu0 %v2566
    %2682 = vmatprep.subr.bf16.mxu0 0
    %2683 = vmatpush1.bf16.msra.mxu0 %v2567
    %2684 = vmatprep.subr.bf16.mxu0 0
    %2685 = vmatpush1.bf16.msra.mxu0 %v2568
    %2686 = vmatprep.subr.bf16.mxu0 0
    %2687 = vmatpush1.bf16.msra.mxu0 %v2569
    %2688 = vmatprep.subr.bf16.mxu0 0
    %2689 = vmatpush1.bf16.msra.mxu0 %v2570
    %2690 = vmatprep.subr.bf16.mxu0 0
    %2691 = vmatpush1.bf16.msra.mxu0 %v2571
    %2692 = vmatprep.mubr.bf16.mxu0 %v2194
    %2693 = vmatmul.mubr.bf16.gmra.mrb[0].mxu0 %v2193
    %v2694 = vpop.f32.mrb[0].mxu0
    %v2695 = vadd.f32 %v2655, %v2694
    %v2696 = vpop.f32.mrb[0].mxu0
    %v2697 = vpop.f32.mrb[0].mxu0
    %v2698 = vpop.f32.mrb[0].mxu0
    %2699 = vdwg.mxu0
    %2700 = vmatprep.subr.bf16.mxu0 0
    %2701 = vmatpush1.bf16.msra.mxu0 %v2572
    %2702 = vmatprep.subr.bf16.mxu0 0
    %2703 = vmatpush1.bf16.msra.mxu0 %v2573
    %2704 = vmatprep.subr.bf16.mxu0 0
    %2705 = vmatpush1.bf16.msra.mxu0 %v2574
    %2706 = vmatprep.subr.bf16.mxu0 0
    %2707 = vmatpush1.bf16.msra.mxu0 %v2575
    %2708 = vmatprep.subr.bf16.mxu0 0
    %2709 = vmatpush1.bf16.msra.mxu0 %v2576
    %2710 = vmatprep.subr.bf16.mxu0 0
    %2711 = vmatpush1.bf16.msra.mxu0 %v2577
    %2712 = vmatprep.subr.bf16.mxu0 0
    %2713 = vmatpush1.bf16.msra.mxu0 %v2578
    %2714 = vmatprep.subr.bf16.mxu0 0
    %2715 = vmatpush1.bf16.msra.mxu0 %v2579
    %2716 = vmatprep.subr.bf16.mxu0 0
    %2717 = vmatpush1.bf16.msra.mxu0 0
    %2718 = vmatprep.subr.bf16.mxu0 0
    %2719 = vmatpush1.bf16.msra.mxu0 0
    %2720 = vmatprep.subr.bf16.mxu0 0
    %2721 = vmatpush1.bf16.msra.mxu0 0
    %2722 = vmatprep.subr.bf16.mxu0 0
    %2723 = vmatpush1.bf16.msra.mxu0 0
    %2724 = vmatprep.subr.bf16.mxu0 0
    %2725 = vmatpush1.bf16.msra.mxu0 0
    %2726 = vmatprep.subr.bf16.mxu0 0
    %2727 = vmatpush1.bf16.msra.mxu0 0
    %2728 = vmatprep.subr.bf16.mxu0 0
    %2729 = vmatpush1.bf16.msra.mxu0 0
    %2730 = vmatprep.subr.bf16.mxu0 0
    %2731 = vmatpush1.bf16.msra.mxu0 0
    %2732 = vmatprep.mubr.bf16.mxu0 0
    %2733 = vmatmul.mubr.bf16.gmra.mrb[0].mxu0 %v2195
    %v2734 = vpop.f32.mrb[0].mxu0
    %v2735 = vadd.f32 %v2695, %v2734
    %v2736 = vpop.f32.mrb[0].mxu0
    %v2737 = vpop.f32.mrb[0].mxu0
    %v2738 = vpop.f32.mrb[0].mxu0
    %2739 = vdwg.mxu0
    %v2740 = vld [vmem:[%s7] sm:$0x1]
    %v2742 = vlaneseq
    %v2743 = vshrl.u32 %v2742, 7
    %v2744 = vsub.s32 0, %v2743
    %v2745 = vrot.slane %v2740, %v2744
    %v2747 = vadd.f32 %v2735, %v2745
    %v2748 = vpack.c.bf16 %v2747, %v2747
    %2749 = vst [vmem:[#allocation11] sm:$0xf] %v2748
    // Predicated region
    $region54: #{tpu_custom_call.1} parent=1 // pred_check
      _
    $region55: #{tpu_custom_call.1} parent=1 // pred_check_branch
      %2751 = sbr.rel (0) target = $region57
    $region56: #{tpu_custom_call.1} parent=1 // pred_region
      %s2753 = ssub.s32 64, 64
      %2754 = vsyncadd [#allocation4], %s2753
      %s2756 = sshll.u32 [#allocation11], 4
      %s2757 = int_to_ptr.vmem [resolvable:$true] %s2756
      %2759 = dma.vmem_to_hbm [thread:$0]  %s2757, 64, %s8, [#allocation4]
    $region57: #{tpu_custom_call.1} parent=1 // pred_fallthru
      _
    // Predicated region
    $region58: #{tpu_custom_call.1} parent=1 // pred_check
      _
    $region59: #{tpu_custom_call.1} parent=1 // pred_check_branch
      %2761 = sbr.rel (0) target = $region61
    $region60: #{tpu_custom_call.1} parent=1 // pred_region
      %2762 = dma.done [#allocation4], 64
    $region61: #{tpu_custom_call.1} parent=1 // pred_fallthru
      _
    %2763 = vsyncpa [#allocation3], 1
    %2764 = vsyncpa [#allocation6], 1
    %2765 = vsyncpa [#allocation9], 1
    %2766 = vsyncpa [#allocation4], 1

</llo_original>
